<compile_context>
chip_gen: v7x
topology: tpu7x:2x2x1
jax: 0.10.0
libtpu: 0.0.40
codegen_flags: <defaults>
</compile_context>

<pallas_src>
import jax
import jax.numpy as jnp
from jax.experimental import pallas as pl
from jax.experimental.pallas import tpu as pltpu

LANE = 128


def _round_up(x, m):
    return (x + m - 1) // m * m


def _cdiv(a, b):
    return -(-a // b)


# ----------------------------------------------------------------------------
# Fused kernel: His-Linear + (split-K) Mark-Linear + fc_out(concat) in one pass
# Grid: (batch_tiles, k_chunks) with the K axis last ("arbitrary").
# ----------------------------------------------------------------------------
def _mine_task_kernel(his_ref, mark_ref, w1_ref, b1_ref, w2_ref, b2_ref,
                      w3h_ref, w3m_ref, b3_ref, o_ref, acc_ref):
    k = pl.program_id(1)
    nk = pl.num_programs(1)
    cd = w2_ref.dtype          # compute dtype == pre-baked weight dtype

    # --- Mark head: split-K accumulation into an f32 scratch -----------------
    @pl.when(k == 0)
    def _():
        acc_ref[...] = jnp.zeros_like(acc_ref)

    acc_ref[...] += jnp.dot(mark_ref[...].astype(cd), w2_ref[...],
                            preferred_element_type=jnp.float32)

    # --- Last K step: His head + fc_out on the (virtual) concat, then store --
    @pl.when(k == nk - 1)
    def _():
        h = jnp.dot(his_ref[...].astype(cd), w1_ref[...],
                    preferred_element_type=jnp.float32) + b1_ref[...]
        m = acc_ref[...] + b2_ref[...]
        # fc_out(concat(h, m)) == h @ W3[:dim] + m @ W3[dim:]   (no concat)
        # NOTE: for bf16 weights, h/m are re-rounded to bf16 before this dot
        # (one extra rounding vs pure "bf16 in, f32 accumulate").
        out = jnp.dot(h.astype(cd), w3h_ref[...],
                      preferred_element_type=jnp.float32)
        out = out + jnp.dot(m.astype(cd), w3m_ref[...],
                            preferred_element_type=jnp.float32)
        out = out + b3_ref[...]
        o_ref[...] = out.astype(o_ref.dtype)


# ----------------------------------------------------------------------------
# Wrapper: batch tiling + Mark-K split + single pallas_call
# ----------------------------------------------------------------------------
def mine_task_forward(params, His, Mark, *, block_b=512):
    """His: [B, dim]; Mark: [B, 3*dim] -> [B, output_dim] (Mine_Task.forward)."""
    B, d1 = His.shape
    d2 = Mark.shape[1]
    w1, b1 = params["His"]
    w2, b2 = params["Mark"]
    w3h, w3m, b3 = params["fc_out"]
    hid = w1.shape[1]
    dout_p = w3h.shape[1]          # lane-padded output width (multiple of 128)
    out_dim = params["out_dim"]

    compute_dtype = w1.dtype
    # bf16 packs two rows per sublane: round batch tiles to 16 rows then.
    row_mult = 8 if jnp.dtype(compute_dtype).itemsize >= 4 else 16

    # --- batch tiling (no jnp.pad: ragged last block handled by Pallas) ------
    bp = _round_up(B, row_mult)
    if 2 * row_mult <= bp <= block_b:
        # whole batch would fit in one tile: split in two so v7x's two
        # TensorCores both get a program on the "parallel" axis.
        tm = _round_up(_cdiv(bp, 2), row_mult)
    else:
        tm = min(block_b, bp)
    grid_b = _cdiv(B, tm)

    # --- Mark K split: `dim`-wide chunks so W2 DMA pipelines against the MXU -
    if d2 % d1 == 0 and d1 % LANE == 0:
        kc = d1
    else:
        kc = d2
    nk = d2 // kc

    def _call(weight_pipeline_mode):
        def const_spec(shape):
            # grid-invariant block (weights / biases): same index every step
            return pl.BlockSpec(shape, lambda i, k: (0, 0),
                                pipeline_mode=weight_pipeline_mode)

        return pl.pallas_call(
            _mine_task_kernel,
            out_shape=jax.ShapeDtypeStruct((B, dout_p), jnp.float32),
            grid_spec=pltpu.PrefetchScalarGridSpec(
                num_scalar_prefetch=0,
                grid=(grid_b, nk),
                in_specs=[
                    pl.BlockSpec((tm, d1), lambda i, k: (i, 0)),   # His tile
                    pl.BlockSpec((tm, kc), lambda i, k: (i, k)),   # Mark K-chunk
                    const_spec((d1, hid)),                         # W1 [in,out]
                    const_spec((1, hid)),                          # b1
                    pl.BlockSpec((kc, hid), lambda i, k: (k, 0)),  # W2 K-chunk
                    const_spec((1, hid)),                          # b2
                    const_spec((hid, dout_p)),                     # W3 top half
                    const_spec((hid, dout_p)),                     # W3 bottom half
                    const_spec((1, dout_p)),                       # b3 (padded)
                ],
                out_specs=pl.BlockSpec((tm, dout_p), lambda i, k: (i, 0)),
                scratch_shapes=[pltpu.VMEM((tm, hid), jnp.float32)],
            ),
            compiler_params=pltpu.CompilerParams(
                dimension_semantics=("parallel", "arbitrary"),
                vmem_limit_bytes=48 * 1024 * 1024,   # < v7x's 64 MiB physical
            ),
        )(His, Mark, w1, b1, w2, b2, w3h, w3m, b3)

    try:
        # Single-buffer the grid-invariant weight/bias blocks (frees VMEM).
        out = _call(pl.Buffered(1))
    except Exception:
        # Fallback: default (double) buffering if Buffered(1) is unsupported.
        out = _call(None)

    return out[:, :out_dim]


# ----------------------------------------------------------------------------
# Parameter construction: nn.Linear-style init, layout pre-baked for the kernel
#   (weights pre-transposed to [in,out], biases [1,D], fc_out lane-padded+split)
# ----------------------------------------------------------------------------
def make_mine_task_params(key, dim=512, output_dim=4, dtype=jnp.float32):
    def linear(k, din, dout):
        kw, kb = jax.random.split(k)
        bound = 1.0 / (din ** 0.5)
        w = jax.random.uniform(kw, (din, dout), dtype, -bound, bound)  # [in, out]
        b = jax.random.uniform(kb, (1, dout), dtype, -bound, bound)
        return w, b

    k1, k2, k3 = jax.random.split(key, 3)
    w1, b1 = linear(k1, dim, dim)              # self.His    = Linear(dim, dim)
    w2, b2 = linear(k2, 3 * dim, dim)          # self.Mark   = Linear(3*dim, dim)
    w3, b3 = linear(k3, 2 * dim, output_dim)   # self.fc_out = Linear(2*dim, 4)

    # Lane-pad fc_out to a multiple of 128 and split its K between the heads.
    dout_p = _round_up(output_dim, LANE)
    w3p = jnp.pad(w3, ((0, 0), (0, dout_p - output_dim)))
    b3p = jnp.pad(b3, ((0, 0), (0, dout_p - output_dim)))
    w3_his = w3p[:dim]      # multiplies the His-head output
    w3_mark = w3p[dim:]     # multiplies the Mark-head output

    return {
        "His": (w1, b1),
        "Mark": (w2, b2),
        "fc_out": (w3_his, w3_mark, b3p),
        "out_dim": output_dim,
    }


def cast_weights(params, compute_dtype):
    """One-time pre-bake of compute-dtype (e.g. bf16) weight copies.

    Biases stay f32 (added to the f32 MXU accumulator). Call this ONCE; the
    forward pass never casts weights per call."""
    w1, b1 = params["His"]
    w2, b2 = params["Mark"]
    w3h, w3m, b3 = params["fc_out"]
    return {
        "His": (w1.astype(compute_dtype), b1),
        "Mark": (w2.astype(compute_dtype), b2),
        "fc_out": (w3h.astype(compute_dtype), w3m.astype(compute_dtype), b3),
        "out_dim": params["out_dim"],
    }


# TODO(synk): criterion_ce_Task / criterion_ce_His and calculateLoss_Task are
# training-time class-weighted CrossEntropy losses (with .cuda placement);
# they are not part of the forward pass and are not implemented here.


# ----------------------------------------------------------------------------
# Demo / smoke test
# ----------------------------------------------------------------------------
if __name__ == "__main__":
    # Small shapes consistent with the module structure (module default dim=512).
    B = 24            # not a multiple of the batch tile -> exercises ragged path
    dim = 128
    out_dim = 4

    key = jax.random.PRNGKey(0)
    kp, kh, km = jax.random.split(key, 3)
    params = make_mine_task_params(kp, dim=dim, output_dim=out_dim)

    His = jax.random.normal(kh, (B, dim), jnp.float32)
    Mark = jax.random.normal(km, (B, 3 * dim), jnp.float32)

    # f32 compute path
    out = jax.block_until_ready(mine_task_forward(params, His, Mark))

    # plain-JAX reference, identical math to Mine_Task.forward
    w1, b1 = params["His"]
    w2, b2 = params["Mark"]
    w3h, w3m, b3 = params["fc_out"]
    h_ref = His @ w1 + b1
    m_ref = Mark @ w2 + b2
    task = jnp.concatenate((h_ref, m_ref), axis=1)
    w3_full = jnp.concatenate((w3h, w3m), axis=0)[:, :out_dim]
    ref = task @ w3_full + b3[:, :out_dim]

    assert out.shape == (B, out_dim)
    assert jnp.allclose(out, ref, atol=1e-4, rtol=1e-4), float(
        jnp.max(jnp.abs(out - ref)))

    # bf16 weight path: weights pre-baked ONCE (no per-forward .astype),
    # activations stay f32 in HBM and are cast to bf16 inside the kernel.
    params_bf16 = cast_weights(params, jnp.bfloat16)
    out_bf16 = jax.block_until_ready(mine_task_forward(params_bf16, His, Mark))
    assert out_bf16.shape == (B, out_dim)
    assert jnp.allclose(out_bf16, ref, atol=1e-1, rtol=1e-1)

    print("KERNEL_OK")
</pallas_src>

<mosaic_0001>
module attributes {stable_mosaic.version = 11 : i64} {
  func.func @_mine_task_kernel(%arg0: i32, %arg1: i32, %arg2: memref<16x128xf32, #tpu.memory_space<vmem>>, %arg3: memref<16x128xf32, #tpu.memory_space<vmem>>, %arg4: memref<128x128xf32, #tpu.memory_space<vmem>>, %arg5: memref<1x128xf32, #tpu.memory_space<vmem>>, %arg6: memref<128x128xf32, #tpu.memory_space<vmem>>, %arg7: memref<1x128xf32, #tpu.memory_space<vmem>>, %arg8: memref<128x128xf32, #tpu.memory_space<vmem>>, %arg9: memref<128x128xf32, #tpu.memory_space<vmem>>, %arg10: memref<1x128xf32, #tpu.memory_space<vmem>>, %arg11: memref<16x128xf32, #tpu.memory_space<vmem>>, %arg12: memref<16x128xf32, #tpu.memory_space<vmem>>) attributes {dimension_semantics = [#tpu.dimension_semantics<parallel>, #tpu.dimension_semantics<arbitrary>], iteration_bounds = array<i64: 2, 3>, scalar_prefetch = 0 : i64, scratch_operands = 1 : i64, tpu.core_type = #tpu.core_type<tc>, window_params = [{transform_indices = @transform_0, window_bounds = array<i64: 16, 128>}, {transform_indices = @transform_1, window_bounds = array<i64: 16, 128>}, {pipeline_mode = #tpu.pipeline_mode<synchronous>, transform_indices = @transform_2, window_bounds = array<i64: 128, 128>}, {pipeline_mode = #tpu.pipeline_mode<synchronous>, transform_indices = @transform_3, window_bounds = array<i64: 1, 128>}, {transform_indices = @transform_4, window_bounds = array<i64: 128, 128>}, {pipeline_mode = #tpu.pipeline_mode<synchronous>, transform_indices = @transform_5, window_bounds = array<i64: 1, 128>}, {pipeline_mode = #tpu.pipeline_mode<synchronous>, transform_indices = @transform_6, window_bounds = array<i64: 128, 128>}, {pipeline_mode = #tpu.pipeline_mode<synchronous>, transform_indices = @transform_7, window_bounds = array<i64: 128, 128>}, {pipeline_mode = #tpu.pipeline_mode<synchronous>, transform_indices = @transform_8, window_bounds = array<i64: 1, 128>}, {transform_indices = @transform_9, window_bounds = array<i64: 16, 128>}]} {
    %c0_i32 = arith.constant 0 : i32
    %0 = arith.cmpi eq, %arg1, %c0_i32 : i32
    %1 = arith.extui %0 : i1 to i32
    %c0_i32_0 = arith.constant 0 : i32
    %2 = arith.cmpi ne, %1, %c0_i32_0 : i32
    scf.if %2 {
      %cst_9 = arith.constant 0.000000e+00 : f32
      %12 = vector.broadcast %cst_9 : f32 to vector<16x128xf32>
      %c0_10 = arith.constant 0 : index
      %c0_11 = arith.constant 0 : index
      %13 = vector.load %arg12[%c0_10, %c0_11] : memref<16x128xf32, #tpu.memory_space<vmem>>, vector<16x128xf32>
      tpu.vector_store %arg12[%c0_10, %c0_11], %12 {strides = array<i32>} : memref<16x128xf32, #tpu.memory_space<vmem>>, vector<16x128xf32>,
    } else {
    }
    %c0 = arith.constant 0 : index
    %c0_1 = arith.constant 0 : index
    %3 = vector.load %arg12[%c0, %c0_1] : memref<16x128xf32, #tpu.memory_space<vmem>>, vector<16x128xf32>
    %c0_2 = arith.constant 0 : index
    %c0_3 = arith.constant 0 : index
    %4 = vector.load %arg3[%c0_2, %c0_3] : memref<16x128xf32, #tpu.memory_space<vmem>>, vector<16x128xf32>
    %c0_4 = arith.constant 0 : index
    %c0_5 = arith.constant 0 : index
    %5 = vector.load %arg6[%c0_4, %c0_5] : memref<128x128xf32, #tpu.memory_space<vmem>>, vector<128x128xf32>
    %cst = arith.constant dense<0.000000e+00> : vector<16x128xf32>
    %6 = tpu.matmul %4, %5, %cst {dimension_numbers = #tpu.dot_dimension_numbers<[1], [0], [0], [1], [0, 0, 1, 1], [], []>} : vector<16x128xf32>, vector<128x128xf32>, vector<16x128xf32> -> vector<16x128xf32>
    %7 = arith.addf %3, %6 : vector<16x128xf32>
    %c0_6 = arith.constant 0 : index
    %c0_7 = arith.constant 0 : index
    %8 = vector.load %arg12[%c0_6, %c0_7] : memref<16x128xf32, #tpu.memory_space<vmem>>, vector<16x128xf32>
    tpu.vector_store %arg12[%c0_6, %c0_7], %7 {strides = array<i32>} : memref<16x128xf32, #tpu.memory_space<vmem>>, vector<16x128xf32>,
    %c2_i32 = arith.constant 2 : i32
    %9 = arith.cmpi eq, %arg1, %c2_i32 : i32
    %10 = arith.extui %9 : i1 to i32
    %c0_i32_8 = arith.constant 0 : i32
    %11 = arith.cmpi ne, %10, %c0_i32_8 : i32
    scf.if %11 {
      %c0_9 = arith.constant 0 : index
      %c0_10 = arith.constant 0 : index
      %12 = vector.load %arg2[%c0_9, %c0_10] : memref<16x128xf32, #tpu.memory_space<vmem>>, vector<16x128xf32>
      %c0_11 = arith.constant 0 : index
      %c0_12 = arith.constant 0 : index
      %13 = vector.load %arg4[%c0_11, %c0_12] : memref<128x128xf32, #tpu.memory_space<vmem>>, vector<128x128xf32>
      %cst_13 = arith.constant dense<0.000000e+00> : vector<16x128xf32>
      %14 = tpu.matmul %12, %13, %cst_13 {dimension_numbers = #tpu.dot_dimension_numbers<[1], [0], [0], [1], [0, 0, 1, 1], [], []>} : vector<16x128xf32>, vector<128x128xf32>, vector<16x128xf32> -> vector<16x128xf32>
      %c0_14 = arith.constant 0 : index
      %c0_15 = arith.constant 0 : index
      %15 = vector.load %arg5[%c0_14, %c0_15] : memref<1x128xf32, #tpu.memory_space<vmem>>, vector<1x128xf32>
      %16 = vector.broadcast %15 : vector<1x128xf32> to vector<16x128xf32>
      %17 = arith.addf %14, %16 : vector<16x128xf32>
      %c0_16 = arith.constant 0 : index
      %c0_17 = arith.constant 0 : index
      %18 = vector.load %arg12[%c0_16, %c0_17] : memref<16x128xf32, #tpu.memory_space<vmem>>, vector<16x128xf32>
      %c0_18 = arith.constant 0 : index
      %c0_19 = arith.constant 0 : index
      %19 = vector.load %arg7[%c0_18, %c0_19] : memref<1x128xf32, #tpu.memory_space<vmem>>, vector<1x128xf32>
      %20 = vector.broadcast %19 : vector<1x128xf32> to vector<16x128xf32>
      %21 = arith.addf %18, %20 : vector<16x128xf32>
      %c0_20 = arith.constant 0 : index
      %c0_21 = arith.constant 0 : index
      %22 = vector.load %arg8[%c0_20, %c0_21] : memref<128x128xf32, #tpu.memory_space<vmem>>, vector<128x128xf32>
      %cst_22 = arith.constant dense<0.000000e+00> : vector<16x128xf32>
      %23 = tpu.matmul %17, %22, %cst_22 {dimension_numbers = #tpu.dot_dimension_numbers<[1], [0], [0], [1], [0, 0, 1, 1], [], []>} : vector<16x128xf32>, vector<128x128xf32>, vector<16x128xf32> -> vector<16x128xf32>
      %c0_23 = arith.constant 0 : index
      %c0_24 = arith.constant 0 : index
      %24 = vector.load %arg9[%c0_23, %c0_24] : memref<128x128xf32, #tpu.memory_space<vmem>>, vector<128x128xf32>
      %cst_25 = arith.constant dense<0.000000e+00> : vector<16x128xf32>
      %25 = tpu.matmul %21, %24, %cst_25 {dimension_numbers = #tpu.dot_dimension_numbers<[1], [0], [0], [1], [0, 0, 1, 1], [], []>} : vector<16x128xf32>, vector<128x128xf32>, vector<16x128xf32> -> vector<16x128xf32>
      %26 = arith.addf %23, %25 : vector<16x128xf32>
      %c0_26 = arith.constant 0 : index
      %c0_27 = arith.constant 0 : index
      %27 = vector.load %arg10[%c0_26, %c0_27] : memref<1x128xf32, #tpu.memory_space<vmem>>, vector<1x128xf32>
      %28 = vector.broadcast %27 : vector<1x128xf32> to vector<16x128xf32>
      %29 = arith.addf %26, %28 : vector<16x128xf32>
      %c0_28 = arith.constant 0 : index
      %c0_29 = arith.constant 0 : index
      %30 = vector.load %arg11[%c0_28, %c0_29] : memref<16x128xf32, #tpu.memory_space<vmem>>, vector<16x128xf32>
      tpu.vector_store %arg11[%c0_28, %c0_29], %29 {strides = array<i32>} : memref<16x128xf32, #tpu.memory_space<vmem>>, vector<16x128xf32>,
    } else {
    }
    return
  }
  func.func @transform_0(%arg0: i32, %arg1: i32) -> (i32, i32) {
    %c0_i32 = arith.constant 0 : i32
    %c0_i32_0 = arith.constant 0 : i32
    return %arg0, %c0_i32 : i32, i32
  }
  func.func @transform_1(%arg0: i32, %arg1: i32) -> (i32, i32) {
    %c0_i32 = arith.constant 0 : i32
    return %arg0, %arg1 : i32, i32
  }
  func.func @transform_2(%arg0: i32, %arg1: i32) -> (i32, i32) {
    %c0_i32 = arith.constant 0 : i32
    %c0_i32_0 = arith.constant 0 : i32
    %c0_i32_1 = arith.constant 0 : i32
    return %c0_i32, %c0_i32_0 : i32, i32
  }
  func.func @transform_3(%arg0: i32, %arg1: i32) -> (i32, i32) {
    %c0_i32 = arith.constant 0 : i32
    %c0_i32_0 = arith.constant 0 : i32
    %c0_i32_1 = arith.constant 0 : i32
    return %c0_i32, %c0_i32_0 : i32, i32
  }
  func.func @transform_4(%arg0: i32, %arg1: i32) -> (i32, i32) {
    %c0_i32 = arith.constant 0 : i32
    %c0_i32_0 = arith.constant 0 : i32
    return %arg1, %c0_i32 : i32, i32
  }
  func.func @transform_5(%arg0: i32, %arg1: i32) -> (i32, i32) {
    %c0_i32 = arith.constant 0 : i32
    %c0_i32_0 = arith.constant 0 : i32
    %c0_i32_1 = arith.constant 0 : i32
    return %c0_i32, %c0_i32_0 : i32, i32
  }
  func.func @transform_6(%arg0: i32, %arg1: i32) -> (i32, i32) {
    %c0_i32 = arith.constant 0 : i32
    %c0_i32_0 = arith.constant 0 : i32
    %c0_i32_1 = arith.constant 0 : i32
    return %c0_i32, %c0_i32_0 : i32, i32
  }
  func.func @transform_7(%arg0: i32, %arg1: i32) -> (i32, i32) {
    %c0_i32 = arith.constant 0 : i32
    %c0_i32_0 = arith.constant 0 : i32
    %c0_i32_1 = arith.constant 0 : i32
    return %c0_i32, %c0_i32_0 : i32, i32
  }
  func.func @transform_8(%arg0: i32, %arg1: i32) -> (i32, i32) {
    %c0_i32 = arith.constant 0 : i32
    %c0_i32_0 = arith.constant 0 : i32
    %c0_i32_1 = arith.constant 0 : i32
    return %c0_i32, %c0_i32_0 : i32, i32
  }
  func.func @transform_9(%arg0: i32, %arg1: i32) -> (i32, i32) {
    %c0_i32 = arith.constant 0 : i32
    %c0_i32_0 = arith.constant 0 : i32
    return %arg0, %c0_i32 : i32, i32
  }
}

module attributes {stable_mosaic.version = 11 : i64} {
  func.func @_mine_task_kernel(%arg0: i32, %arg1: i32, %arg2: memref<16x128xf32, #tpu.memory_space<vmem>>, %arg3: memref<16x128xf32, #tpu.memory_space<vmem>>, %arg4: memref<128x128xf32, #tpu.memory_space<vmem>>, %arg5: memref<1x128xf32, #tpu.memory_space<vmem>>, %arg6: memref<128x128xf32, #tpu.memory_space<vmem>>, %arg7: memref<1x128xf32, #tpu.memory_space<vmem>>, %arg8: memref<128x128xf32, #tpu.memory_space<vmem>>, %arg9: memref<128x128xf32, #tpu.memory_space<vmem>>, %arg10: memref<1x128xf32, #tpu.memory_space<vmem>>, %arg11: memref<16x128xf32, #tpu.memory_space<vmem>>, %arg12: memref<16x128xf32, #tpu.memory_space<vmem>>) attributes {dimension_semantics = [#tpu.dimension_semantics<parallel>, #tpu.dimension_semantics<arbitrary>], iteration_bounds = array<i64: 2, 3>, scalar_prefetch = 0 : i64, scratch_operands = 1 : i64, tpu.core_type = #tpu.core_type<tc>, window_params = [{transform_indices = @transform_0, window_bounds = array<i64: 16, 128>}, {transform_indices = @transform_1, window_bounds = array<i64: 16, 128>}, {pipeline_mode = #tpu.pipeline_mode<synchronous>, transform_indices = @transform_2, window_bounds = array<i64: 128, 128>}, {pipeline_mode = #tpu.pipeline_mode<synchronous>, transform_indices = @transform_3, window_bounds = array<i64: 1, 128>}, {transform_indices = @transform_4, window_bounds = array<i64: 128, 128>}, {pipeline_mode = #tpu.pipeline_mode<synchronous>, transform_indices = @transform_5, window_bounds = array<i64: 1, 128>}, {pipeline_mode = #tpu.pipeline_mode<synchronous>, transform_indices = @transform_6, window_bounds = array<i64: 128, 128>}, {pipeline_mode = #tpu.pipeline_mode<synchronous>, transform_indices = @transform_7, window_bounds = array<i64: 128, 128>}, {pipeline_mode = #tpu.pipeline_mode<synchronous>, transform_indices = @transform_8, window_bounds = array<i64: 1, 128>}, {transform_indices = @transform_9, window_bounds = array<i64: 16, 128>}]} {
    %c0_i32 = arith.constant 0 : i32
    %0 = arith.cmpi eq, %arg1, %c0_i32 : i32
    %1 = arith.extui %0 : i1 to i32
    %c0_i32_0 = arith.constant 0 : i32
    %2 = arith.cmpi ne, %1, %c0_i32_0 : i32
    scf.if %2 {
      %cst_9 = arith.constant 0.000000e+00 : f32
      %12 = vector.broadcast %cst_9 : f32 to vector<16x128xf32>
      %c0_10 = arith.constant 0 : index
      %c0_11 = arith.constant 0 : index
      %13 = vector.load %arg12[%c0_10, %c0_11] : memref<16x128xf32, #tpu.memory_space<vmem>>, vector<16x128xf32>
      tpu.vector_store %arg12[%c0_10, %c0_11], %12 {strides = array<i32>} : memref<16x128xf32, #tpu.memory_space<vmem>>, vector<16x128xf32>,
    } else {
    }
    %c0 = arith.constant 0 : index
    %c0_1 = arith.constant 0 : index
    %3 = vector.load %arg12[%c0, %c0_1] : memref<16x128xf32, #tpu.memory_space<vmem>>, vector<16x128xf32>
    %c0_2 = arith.constant 0 : index
    %c0_3 = arith.constant 0 : index
    %4 = vector.load %arg3[%c0_2, %c0_3] : memref<16x128xf32, #tpu.memory_space<vmem>>, vector<16x128xf32>
    %c0_4 = arith.constant 0 : index
    %c0_5 = arith.constant 0 : index
    %5 = vector.load %arg6[%c0_4, %c0_5] : memref<128x128xf32, #tpu.memory_space<vmem>>, vector<128x128xf32>
    %cst = arith.constant dense<0.000000e+00> : vector<16x128xf32>
    %6 = tpu.matmul %4, %5, %cst {dimension_numbers = #tpu.dot_dimension_numbers<[1], [0], [0], [1], [0, 0, 1, 1], [], []>} : vector<16x128xf32>, vector<128x128xf32>, vector<16x128xf32> -> vector<16x128xf32>
    %7 = arith.addf %3, %6 : vector<16x128xf32>
    %c0_6 = arith.constant 0 : index
    %c0_7 = arith.constant 0 : index
    %8 = vector.load %arg12[%c0_6, %c0_7] : memref<16x128xf32, #tpu.memory_space<vmem>>, vector<16x128xf32>
    tpu.vector_store %arg12[%c0_6, %c0_7], %7 {strides = array<i32>} : memref<16x128xf32, #tpu.memory_space<vmem>>, vector<16x128xf32>,
    %c2_i32 = arith.constant 2 : i32
    %9 = arith.cmpi eq, %arg1, %c2_i32 : i32
    %10 = arith.extui %9 : i1 to i32
    %c0_i32_8 = arith.constant 0 : i32
    %11 = arith.cmpi ne, %10, %c0_i32_8 : i32
    scf.if %11 {
      %c0_9 = arith.constant 0 : index
      %c0_10 = arith.constant 0 : index
      %12 = vector.load %arg2[%c0_9, %c0_10] : memref<16x128xf32, #tpu.memory_space<vmem>>, vector<16x128xf32>
      %c0_11 = arith.constant 0 : index
      %c0_12 = arith.constant 0 : index
      %13 = vector.load %arg4[%c0_11, %c0_12] : memref<128x128xf32, #tpu.memory_space<vmem>>, vector<128x128xf32>
      %cst_13 = arith.constant dense<0.000000e+00> : vector<16x128xf32>
      %14 = tpu.matmul %12, %13, %cst_13 {dimension_numbers = #tpu.dot_dimension_numbers<[1], [0], [0], [1], [0, 0, 1, 1], [], []>} : vector<16x128xf32>, vector<128x128xf32>, vector<16x128xf32> -> vector<16x128xf32>
      %c0_14 = arith.constant 0 : index
      %c0_15 = arith.constant 0 : index
      %15 = vector.load %arg5[%c0_14, %c0_15] : memref<1x128xf32, #tpu.memory_space<vmem>>, vector<1x128xf32>
      %16 = vector.broadcast %15 : vector<1x128xf32> to vector<16x128xf32>
      %17 = arith.addf %14, %16 : vector<16x128xf32>
      %c0_16 = arith.constant 0 : index
      %c0_17 = arith.constant 0 : index
      %18 = vector.load %arg12[%c0_16, %c0_17] : memref<16x128xf32, #tpu.memory_space<vmem>>, vector<16x128xf32>
      %c0_18 = arith.constant 0 : index
      %c0_19 = arith.constant 0 : index
      %19 = vector.load %arg7[%c0_18, %c0_19] : memref<1x128xf32, #tpu.memory_space<vmem>>, vector<1x128xf32>
      %20 = vector.broadcast %19 : vector<1x128xf32> to vector<16x128xf32>
      %21 = arith.addf %18, %20 : vector<16x128xf32>
      %c0_20 = arith.constant 0 : index
      %c0_21 = arith.constant 0 : index
      %22 = vector.load %arg8[%c0_20, %c0_21] : memref<128x128xf32, #tpu.memory_space<vmem>>, vector<128x128xf32>
      %cst_22 = arith.constant dense<0.000000e+00> : vector<16x128xf32>
      %23 = tpu.matmul %17, %22, %cst_22 {dimension_numbers = #tpu.dot_dimension_numbers<[1], [0], [0], [1], [0, 0, 1, 1], [], []>} : vector<16x128xf32>, vector<128x128xf32>, vector<16x128xf32> -> vector<16x128xf32>
      %c0_23 = arith.constant 0 : index
      %c0_24 = arith.constant 0 : index
      %24 = vector.load %arg9[%c0_23, %c0_24] : memref<128x128xf32, #tpu.memory_space<vmem>>, vector<128x128xf32>
      %cst_25 = arith.constant dense<0.000000e+00> : vector<16x128xf32>
      %25 = tpu.matmul %21, %24, %cst_25 {dimension_numbers = #tpu.dot_dimension_numbers<[1], [0], [0], [1], [0, 0, 1, 1], [], []>} : vector<16x128xf32>, vector<128x128xf32>, vector<16x128xf32> -> vector<16x128xf32>
      %26 = arith.addf %23, %25 : vector<16x128xf32>
      %c0_26 = arith.constant 0 : index
      %c0_27 = arith.constant 0 : index
      %27 = vector.load %arg10[%c0_26, %c0_27] : memref<1x128xf32, #tpu.memory_space<vmem>>, vector<1x128xf32>
      %28 = vector.broadcast %27 : vector<1x128xf32> to vector<16x128xf32>
      %29 = arith.addf %26, %28 : vector<16x128xf32>
      %c0_28 = arith.constant 0 : index
      %c0_29 = arith.constant 0 : index
      %30 = vector.load %arg11[%c0_28, %c0_29] : memref<16x128xf32, #tpu.memory_space<vmem>>, vector<16x128xf32>
      tpu.vector_store %arg11[%c0_28, %c0_29], %29 {strides = array<i32>} : memref<16x128xf32, #tpu.memory_space<vmem>>, vector<16x128xf32>,
    } else {
    }
    return
  }
  func.func @transform_0(%arg0: i32, %arg1: i32) -> (i32, i32) {
    %c0_i32 = arith.constant 0 : i32
    %c0_i32_0 = arith.constant 0 : i32
    return %arg0, %c0_i32 : i32, i32
  }
  func.func @transform_1(%arg0: i32, %arg1: i32) -> (i32, i32) {
    %c0_i32 = arith.constant 0 : i32
    return %arg0, %arg1 : i32, i32
  }
  func.func @transform_2(%arg0: i32, %arg1: i32) -> (i32, i32) {
    %c0_i32 = arith.constant 0 : i32
    %c0_i32_0 = arith.constant 0 : i32
    %c0_i32_1 = arith.constant 0 : i32
    return %c0_i32, %c0_i32_0 : i32, i32
  }
  func.func @transform_3(%arg0: i32, %arg1: i32) -> (i32, i32) {
    %c0_i32 = arith.constant 0 : i32
    %c0_i32_0 = arith.constant 0 : i32
    %c0_i32_1 = arith.constant 0 : i32
    return %c0_i32, %c0_i32_0 : i32, i32
  }
  func.func @transform_4(%arg0: i32, %arg1: i32) -> (i32, i32) {
    %c0_i32 = arith.constant 0 : i32
    %c0_i32_0 = arith.constant 0 : i32
    return %arg1, %c0_i32 : i32, i32
  }
  func.func @transform_5(%arg0: i32, %arg1: i32) -> (i32, i32) {
    %c0_i32 = arith.constant 0 : i32
    %c0_i32_0 = arith.constant 0 : i32
    %c0_i32_1 = arith.constant 0 : i32
    return %c0_i32, %c0_i32_0 : i32, i32
  }
  func.func @transform_6(%arg0: i32, %arg1: i32) -> (i32, i32) {
    %c0_i32 = arith.constant 0 : i32
    %c0_i32_0 = arith.constant 0 : i32
    %c0_i32_1 = arith.constant 0 : i32
    return %c0_i32, %c0_i32_0 : i32, i32
  }
  func.func @transform_7(%arg0: i32, %arg1: i32) -> (i32, i32) {
    %c0_i32 = arith.constant 0 : i32
    %c0_i32_0 = arith.constant 0 : i32
    %c0_i32_1 = arith.constant 0 : i32
    return %c0_i32, %c0_i32_0 : i32, i32
  }
  func.func @transform_8(%arg0: i32, %arg1: i32) -> (i32, i32) {
    %c0_i32 = arith.constant 0 : i32
    %c0_i32_0 = arith.constant 0 : i32
    %c0_i32_1 = arith.constant 0 : i32
    return %c0_i32, %c0_i32_0 : i32, i32
  }
  func.func @transform_9(%arg0: i32, %arg1: i32) -> (i32, i32) {
    %c0_i32 = arith.constant 0 : i32
    %c0_i32_0 = arith.constant 0 : i32
    return %arg0, %c0_i32 : i32, i32
  }
}

</mosaic_0001>

<llo_original>
// kernel: tpu_custom_call.1
$region0: #{tpu_custom_call.1}
  #allocation0 [shape = 'u32[]', space=smem, size = 0x4, offset = 0x4, fixed_abs, tag = 'smem constant byte address 0x4 - core index']
  #allocation1 [shape = 'u32[144,128]{1,0:T(1,128)}', space=vmem, size = 0x12000, scoped, tag = 'internal scratch']
  #allocation2 [shape = 'f32[16,128]{1,0:T(8,128)}', space=vmem, size = 0x2000, scoped, tag = 'scratch operand']
  %s0 = inlined_call_operand.hbm [shape: f32[24,128], index: 0, kind: input, shape index: {}]
  %s1 = inlined_call_operand.hbm [shape: f32[24,384], index: 1, kind: input, shape index: {}]
  %s2 = inlined_call_operand.hbm [shape: f32[128,128], index: 2, kind: input, shape index: {}]
  %s3 = inlined_call_operand.vmem [shape: f32[1,128], index: 3, kind: input, shape index: {}]
  %s4 = inlined_call_operand.hbm [shape: f32[384,128], index: 4, kind: input, shape index: {}]
  %s5 = inlined_call_operand.vmem [shape: f32[1,128], index: 5, kind: input, shape index: {}]
  %s6 = inlined_call_operand.hbm [shape: f32[128,128], index: 6, kind: input, shape index: {}]
  %s7 = inlined_call_operand.hbm [shape: f32[128,128], index: 7, kind: input, shape index: {}]
  %s8 = inlined_call_operand.vmem [shape: f32[1,128], index: 8, kind: input, shape index: {}]
  %s9 = inlined_call_operand.hbm [shape: f32[24,128], index: 9, kind: output, shape index: {}]
  %s10 = sld [smem:[#allocation0]]
  $region101: #{tpu_custom_call.1} parent=0
    _
  %s12 = ssub.s32 1, %s10
  %s13 = scalar_select 0, %s12, %s10
  $region1: #{tpu_custom_call.1} parent=0
    #allocation3 [shape = 'u8[16384]{0}', space=vmem, size = 0x4000, scoped, tag = 'input window, operand 0']
    #allocation4 [shape = 's32[2]{0}', space=sflag, size = 0x8, scoped, tag = 'scoped memory for tpu_custom_call.1']
    #allocation5 [shape = 's32[2]{0}', space=sflag, size = 0x8, scoped, tag = 'scoped memory for tpu_custom_call.1']
    #allocation6 [shape = 'u8[16384]{0}', space=vmem, size = 0x4000, scoped, tag = 'input window, operand 1']
    #allocation7 [shape = 's32[2]{0}', space=sflag, size = 0x8, scoped, tag = 'scoped memory for tpu_custom_call.1']
    #allocation8 [shape = 'u8[65536]{0}', space=vmem, size = 0x10000, scoped, tag = 'input window, operand 2, single buffered']
    #allocation9 [shape = 'u8[131072]{0}', space=vmem, size = 0x20000, scoped, tag = 'input window, operand 4']
    #allocation10 [shape = 's32[2]{0}', space=sflag, size = 0x8, scoped, tag = 'scoped memory for tpu_custom_call.1']
    #allocation11 [shape = 'u8[65536]{0}', space=vmem, size = 0x10000, scoped, tag = 'input window, operand 6, single buffered']
    #allocation12 [shape = 'u8[65536]{0}', space=vmem, size = 0x10000, scoped, tag = 'input window, operand 7, single buffered']
    #allocation13 [shape = 's32[1]{0}', space=sflag, size = 0x4, scoped, tag = 'scoped memory for tpu_custom_call.1']
    #allocation14 [shape = 'u8[16384]{0}', space=vmem, size = 0x4000, scoped, tag = 'output window, operand 0']
    %14 = vsyncpa [#allocation4], 0
    %s15 = scalar_lea.sflag [#allocation4], 1
    %16 = vsyncpa %s15, 0
    %17 = vsyncpa [#allocation7], 0
    %s18 = scalar_lea.sflag [#allocation7], 1
    %19 = vsyncpa %s18, 0
    %20 = vsyncpa [#allocation10], 0
    %s21 = scalar_lea.sflag [#allocation10], 1
    %22 = vsyncpa %s21, 0
    %23 = vsyncpa [#allocation13], 0
    %24 = vsyncpa [#allocation5], 0
    %s25 = scalar_lea.sflag [#allocation5], 1
    %26 = vsyncpa %s25, 0
    loop: start=0, step=1, limit=8
    $region2: #{tpu_custom_call.1} parent=1 // loop_pre_header
      _
    $region3: #{tpu_custom_call.1} parent=1 // loop_header
      %s28 = sphi 0, %s32
      %p29 = scmp.ge.s32.totalorder %s28, 8
      %s35 = sphi 0, %s47
      %s36 = sphi 0, %s43
      %s37 = sphi 0, %s35
      %s38 = sphi 0, %s36
      %s39 = sphi 0, %s37
      %s40 = sphi 0, %s38
      %s50 = sphi 0, %s52
      %s53 = sphi 0, %s50
      %s54 = sphi 0, %s53
      %s70 = sphi 0, %s54
      %s78 = sphi 0, %s80
      %s81 = sphi 0, %s78
      %s82 = sphi 0, %s81
      %s98 = sphi 0, %s82
      %s102 = sphi 0, %s102
      %s104 = sphi 0, %s102
      %s105 = sphi 0, %s104
      %s119 = sphi 0, %s105
      %s123 = sphi 0, %s123
      %s125 = sphi 0, %s123
      %s126 = sphi 0, %s125
      %s140 = sphi 0, %s126
      %s146 = sphi 0, %s148
      %s149 = sphi 0, %s146
      %s150 = sphi 0, %s149
      %s166 = sphi 0, %s150
      %s170 = sphi 0, %s170
      %s172 = sphi 0, %s170
      %s173 = sphi 0, %s172
      %s187 = sphi 0, %s173
      %s191 = sphi 0, %s191
      %s193 = sphi 0, %s191
      %s194 = sphi 0, %s193
      %s208 = sphi 0, %s194
      %s212 = sphi 0, %s212
      %s214 = sphi 0, %s212
      %s215 = sphi 0, %s214
      %s229 = sphi 0, %s215
      %s233 = sphi 0, %s233
      %s235 = sphi 0, %s233
      %s236 = sphi 0, %s235
      %s250 = sphi 0, %s236
      %s256 = sphi 0, %s258
      %s259 = sphi 0, %s256
      %s260 = sphi 0, %s259
      %s276 = sphi 0, %s260
    $region4: #{tpu_custom_call.1} parent=1 // loop_header_branch
      %31 = sbr.rel (%p29) target = $region8
    $region5: #{tpu_custom_call.1} parent=1 // loop_body
      %s33 = ssub.s32 %s28, 1
      %s34 = ssub.s32 %s28, 2
      %s41 = sadd.s32 1, %s36
      %p42 = scmp.ge.s32.totalorder %s41, 3
      %s43 = scalar_select %p42, 0, %s41
      %s44 = sadd.s32 1, %s35
      %s45 = scalar_select %p42, %s44, %s35
      %p46 = scmp.ge.s32.totalorder %s45, 2
      %s47 = scalar_select %p46, 0, %s45
      %s48 = ssub.s32 %s35, %s47
      %p49 = scmp.eq.s32.totalorder %s48, 0
      %s51 = sadd.s32 %s50, 1
      %s52 = scalar_select %p49, %s50, %s51
      %p55 = pneg %p49
      %p56 = scmp.eq.s32.totalorder %s28, 5
      %p57 = por %p55, %p56
      %p58 = scmp.ne.s32.totalorder %s50, %s53
      %p59 = scmp.eq.s32.totalorder %s28, 0
      %p60 = por %p58, %p59
      %p61 = scmp.ne.s32.totalorder %s50, %s53
      %p62 = scmp.eq.s32.totalorder %s33, 5
      %p63 = por %p61, %p62
      %p64 = scmp.ne.s32.totalorder %s53, %s54
      %p65 = scmp.eq.s32.totalorder %s33, 0
      %p66 = por %p64, %p65
      %p67 = scmp.ne.s32.totalorder %s53, %s54
      %p68 = scmp.eq.s32.totalorder %s34, 5
      %p69 = por %p67, %p68
      %p71 = scmp.ne.s32.totalorder %s54, %s70
      %p72 = scmp.eq.s32.totalorder %s34, 0
      %p73 = por %p71, %p72
      %s74 = ssub.s32 %s35, %s47
      %s75 = ssub.s32 %s36, %s43
      %s76 = sor.u32 %s74, %s75
      %p77 = scmp.eq.s32.totalorder %s76, 0
      %s79 = sadd.s32 %s78, 1
      %s80 = scalar_select %p77, %s78, %s79
      %p83 = pneg %p77
      %p84 = scmp.eq.s32.totalorder %s28, 5
      %p85 = por %p83, %p84
      %p86 = scmp.ne.s32.totalorder %s78, %s81
      %p87 = scmp.eq.s32.totalorder %s28, 0
      %p88 = por %p86, %p87
      %p89 = scmp.ne.s32.totalorder %s78, %s81
      %p90 = scmp.eq.s32.totalorder %s33, 5
      %p91 = por %p89, %p90
      %p92 = scmp.ne.s32.totalorder %s81, %s82
      %p93 = scmp.eq.s32.totalorder %s33, 0
      %p94 = por %p92, %p93
      %p95 = scmp.ne.s32.totalorder %s81, %s82
      %p96 = scmp.eq.s32.totalorder %s34, 5
      %p97 = por %p95, %p96
      %p99 = scmp.ne.s32.totalorder %s82, %s98
      %p100 = scmp.eq.s32.totalorder %s34, 0
      %p101 = por %p99, %p100
      %s103 = sadd.s32 %s102, 1
      %p106 = scmp.eq.s32.totalorder %s28, 5
      %p107 = scmp.ne.s32.totalorder %s102, %s104
      %p108 = scmp.eq.s32.totalorder %s28, 0
      %p109 = por %p107, %p108
      %p110 = scmp.ne.s32.totalorder %s102, %s104
      %p111 = scmp.eq.s32.totalorder %s33, 5
      %p112 = por %p110, %p111
      %p113 = scmp.ne.s32.totalorder %s104, %s105
      %p114 = scmp.eq.s32.totalorder %s33, 0
      %p115 = por %p113, %p114
      %p116 = scmp.ne.s32.totalorder %s104, %s105
      %p117 = scmp.eq.s32.totalorder %s34, 5
      %p118 = por %p116, %p117
      %p120 = scmp.ne.s32.totalorder %s105, %s119
      %p121 = scmp.eq.s32.totalorder %s34, 0
      %p122 = por %p120, %p121
      %s124 = sadd.s32 %s123, 1
      %p127 = scmp.eq.s32.totalorder %s28, 5
      %p128 = scmp.ne.s32.totalorder %s123, %s125
      %p129 = scmp.eq.s32.totalorder %s28, 0
      %p130 = por %p128, %p129
      %p131 = scmp.ne.s32.totalorder %s123, %s125
      %p132 = scmp.eq.s32.totalorder %s33, 5
      %p133 = por %p131, %p132
      %p134 = scmp.ne.s32.totalorder %s125, %s126
      %p135 = scmp.eq.s32.totalorder %s33, 0
      %p136 = por %p134, %p135
      %p137 = scmp.ne.s32.totalorder %s125, %s126
      %p138 = scmp.eq.s32.totalorder %s34, 5
      %p139 = por %p137, %p138
      %p141 = scmp.ne.s32.totalorder %s126, %s140
      %p142 = scmp.eq.s32.totalorder %s34, 0
      %p143 = por %p141, %p142
      %s144 = ssub.s32 %s36, %s43
      %p145 = scmp.eq.s32.totalorder %s144, 0
      %s147 = sadd.s32 %s146, 1
      %s148 = scalar_select %p145, %s146, %s147
      %p151 = pneg %p145
      %p152 = scmp.eq.s32.totalorder %s28, 5
      %p153 = por %p151, %p152
      %p154 = scmp.ne.s32.totalorder %s146, %s149
      %p155 = scmp.eq.s32.totalorder %s28, 0
      %p156 = por %p154, %p155
      %p157 = scmp.ne.s32.totalorder %s146, %s149
      %p158 = scmp.eq.s32.totalorder %s33, 5
      %p159 = por %p157, %p158
      %p160 = scmp.ne.s32.totalorder %s149, %s150
      %p161 = scmp.eq.s32.totalorder %s33, 0
      %p162 = por %p160, %p161
      %p163 = scmp.ne.s32.totalorder %s149, %s150
      %p164 = scmp.eq.s32.totalorder %s34, 5
      %p165 = por %p163, %p164
      %p167 = scmp.ne.s32.totalorder %s150, %s166
      %p168 = scmp.eq.s32.totalorder %s34, 0
      %p169 = por %p167, %p168
      %s171 = sadd.s32 %s170, 1
      %p174 = scmp.eq.s32.totalorder %s28, 5
      %p175 = scmp.ne.s32.totalorder %s170, %s172
      %p176 = scmp.eq.s32.totalorder %s28, 0
      %p177 = por %p175, %p176
      %p178 = scmp.ne.s32.totalorder %s170, %s172
      %p179 = scmp.eq.s32.totalorder %s33, 5
      %p180 = por %p178, %p179
      %p181 = scmp.ne.s32.totalorder %s172, %s173
      %p182 = scmp.eq.s32.totalorder %s33, 0
      %p183 = por %p181, %p182
      %p184 = scmp.ne.s32.totalorder %s172, %s173
      %p185 = scmp.eq.s32.totalorder %s34, 5
      %p186 = por %p184, %p185
      %p188 = scmp.ne.s32.totalorder %s173, %s187
      %p189 = scmp.eq.s32.totalorder %s34, 0
      %p190 = por %p188, %p189
      %s192 = sadd.s32 %s191, 1
      %p195 = scmp.eq.s32.totalorder %s28, 5
      %p196 = scmp.ne.s32.totalorder %s191, %s193
      %p197 = scmp.eq.s32.totalorder %s28, 0
      %p198 = por %p196, %p197
      %p199 = scmp.ne.s32.totalorder %s191, %s193
      %p200 = scmp.eq.s32.totalorder %s33, 5
      %p201 = por %p199, %p200
      %p202 = scmp.ne.s32.totalorder %s193, %s194
      %p203 = scmp.eq.s32.totalorder %s33, 0
      %p204 = por %p202, %p203
      %p205 = scmp.ne.s32.totalorder %s193, %s194
      %p206 = scmp.eq.s32.totalorder %s34, 5
      %p207 = por %p205, %p206
      %p209 = scmp.ne.s32.totalorder %s194, %s208
      %p210 = scmp.eq.s32.totalorder %s34, 0
      %p211 = por %p209, %p210
      %s213 = sadd.s32 %s212, 1
      %p216 = scmp.eq.s32.totalorder %s28, 5
      %p217 = scmp.ne.s32.totalorder %s212, %s214
      %p218 = scmp.eq.s32.totalorder %s28, 0
      %p219 = por %p217, %p218
      %p220 = scmp.ne.s32.totalorder %s212, %s214
      %p221 = scmp.eq.s32.totalorder %s33, 5
      %p222 = por %p220, %p221
      %p223 = scmp.ne.s32.totalorder %s214, %s215
      %p224 = scmp.eq.s32.totalorder %s33, 0
      %p225 = por %p223, %p224
      %p226 = scmp.ne.s32.totalorder %s214, %s215
      %p227 = scmp.eq.s32.totalorder %s34, 5
      %p228 = por %p226, %p227
      %p230 = scmp.ne.s32.totalorder %s215, %s229
      %p231 = scmp.eq.s32.totalorder %s34, 0
      %p232 = por %p230, %p231
      %s234 = sadd.s32 %s233, 1
      %p237 = scmp.eq.s32.totalorder %s28, 5
      %p238 = scmp.ne.s32.totalorder %s233, %s235
      %p239 = scmp.eq.s32.totalorder %s28, 0
      %p240 = por %p238, %p239
      %p241 = scmp.ne.s32.totalorder %s233, %s235
      %p242 = scmp.eq.s32.totalorder %s33, 5
      %p243 = por %p241, %p242
      %p244 = scmp.ne.s32.totalorder %s235, %s236
      %p245 = scmp.eq.s32.totalorder %s33, 0
      %p246 = por %p244, %p245
      %p247 = scmp.ne.s32.totalorder %s235, %s236
      %p248 = scmp.eq.s32.totalorder %s34, 5
      %p249 = por %p247, %p248
      %p251 = scmp.ne.s32.totalorder %s236, %s250
      %p252 = scmp.eq.s32.totalorder %s34, 0
      %p253 = por %p251, %p252
      %s254 = ssub.s32 %s35, %s47
      %p255 = scmp.eq.s32.totalorder %s254, 0
      %s257 = sadd.s32 %s256, 1
      %s258 = scalar_select %p255, %s256, %s257
      %p261 = pneg %p255
      %p262 = scmp.eq.s32.totalorder %s28, 5
      %p263 = por %p261, %p262
      %p264 = scmp.ne.s32.totalorder %s256, %s259
      %p265 = scmp.eq.s32.totalorder %s28, 0
      %p266 = por %p264, %p265
      %p267 = scmp.ne.s32.totalorder %s256, %s259
      %p268 = scmp.eq.s32.totalorder %s33, 5
      %p269 = por %p267, %p268
      %p270 = scmp.ne.s32.totalorder %s259, %s260
      %p271 = scmp.eq.s32.totalorder %s33, 0
      %p272 = por %p270, %p271
      %p273 = scmp.ne.s32.totalorder %s259, %s260
      %p274 = scmp.eq.s32.totalorder %s34, 5
      %p275 = por %p273, %p274
      %p277 = scmp.ne.s32.totalorder %s260, %s276
      %p278 = scmp.eq.s32.totalorder %s34, 0
      %p279 = por %p277, %p278
      %p280 = scmp.le.s32.totalorder 1, %s28
      %p281 = scmp.lt.s32.totalorder %s28, 7
      %p282 = pnand %p280, %p281
      %p283 = pneg %p282
      // Predicated region
      $region9: #{tpu_custom_call.1} parent=5 // pred_check
        _
      $region10: #{tpu_custom_call.1} parent=5 // pred_check_branch
        %285 = sbr.rel (%p282) target = $region12
      $region11: #{tpu_custom_call.1} parent=5 // pred_region
        %s286 = ssub.s32 %s28, 1
        // Predicated region
        $region13: #{tpu_custom_call.1} parent=11 // pred_check
          %p287 = pneg %p115
        $region14: #{tpu_custom_call.1} parent=11 // pred_check_branch
          %289 = sbr.rel (%p287) target = $region16
        $region15: #{tpu_custom_call.1} parent=11 // pred_region
          %s291 = ssub.s32 2048, 2048
          %292 = vsyncadd [#allocation7], %s291
          %s293 = sshll.u32 [#allocation8], 4
          %s294 = int_to_ptr.vmem [resolvable:$true] %s293
          %299 = dma.hbm_to_vmem [thread:$0]  %s2, 2048, %s294, [#allocation7], 128, 128, 8
        $region16: #{tpu_custom_call.1} parent=11 // pred_fallthru
          _
        // Predicated region
        $region17: #{tpu_custom_call.1} parent=11 // pred_check
          %p300 = pneg %p136
        $region18: #{tpu_custom_call.1} parent=11 // pred_check_branch
          %302 = sbr.rel (%p300) target = $region20
        $region19: #{tpu_custom_call.1} parent=11 // pred_region
          _
        $region20: #{tpu_custom_call.1} parent=11 // pred_fallthru
          _
        // Predicated region
        $region21: #{tpu_custom_call.1} parent=11 // pred_check
          %p303 = pneg %p183
        $region22: #{tpu_custom_call.1} parent=11 // pred_check_branch
          %305 = sbr.rel (%p303) target = $region24
        $region23: #{tpu_custom_call.1} parent=11 // pred_region
          _
        $region24: #{tpu_custom_call.1} parent=11 // pred_fallthru
          _
        // Predicated region
        $region25: #{tpu_custom_call.1} parent=11 // pred_check
          %p306 = pneg %p204
        $region26: #{tpu_custom_call.1} parent=11 // pred_check_branch
          %308 = sbr.rel (%p306) target = $region28
        $region27: #{tpu_custom_call.1} parent=11 // pred_region
          %s310 = ssub.s32 2048, 2048
          %311 = vsyncadd [#allocation10], %s310
          %s312 = sshll.u32 [#allocation11], 4
          %s313 = int_to_ptr.vmem [resolvable:$true] %s312
          %318 = dma.hbm_to_vmem [thread:$0]  %s6, 2048, %s313, [#allocation10], 128, 128, 8
        $region28: #{tpu_custom_call.1} parent=11 // pred_fallthru
          _
        // Predicated region
        $region29: #{tpu_custom_call.1} parent=11 // pred_check
          %p319 = pneg %p225
        $region30: #{tpu_custom_call.1} parent=11 // pred_check_branch
          %321 = sbr.rel (%p319) target = $region32
        $region31: #{tpu_custom_call.1} parent=11 // pred_region
          %s323 = ssub.s32 2048, 2048
          %324 = vsyncadd [#allocation13], %s323
          %s325 = sshll.u32 [#allocation12], 4
          %s326 = int_to_ptr.vmem [resolvable:$true] %s325
          %331 = dma.hbm_to_vmem [thread:$0]  %s7, 2048, %s326, [#allocation13], 128, 128, 8
        $region32: #{tpu_custom_call.1} parent=11 // pred_fallthru
          _
        // Predicated region
        $region33: #{tpu_custom_call.1} parent=11 // pred_check
          %p332 = pneg %p246
        $region34: #{tpu_custom_call.1} parent=11 // pred_check_branch
          %334 = sbr.rel (%p332) target = $region36
        $region35: #{tpu_custom_call.1} parent=11 // pred_region
          _
        $region36: #{tpu_custom_call.1} parent=11 // pred_fallthru
          _
      $region12: #{tpu_custom_call.1} parent=5 // pred_fallthru
        _
      %p335 = scmp.lt.s32.totalorder %s28, 6
      // Predicated region
      $region37: #{tpu_custom_call.1} parent=5 // pred_check
        %p336 = pneg %p335
      $region38: #{tpu_custom_call.1} parent=5 // pred_check_branch
        %338 = sbr.rel (%p336) target = $region40
      $region39: #{tpu_custom_call.1} parent=5 // pred_region
        // Predicated region
        $region41: #{tpu_custom_call.1} parent=39 // pred_check
          %p339 = pneg %p60
        $region42: #{tpu_custom_call.1} parent=39 // pred_check_branch
          %341 = sbr.rel (%p339) target = $region44
        $region43: #{tpu_custom_call.1} parent=39 // pred_region
          %s342 = sand.u32 %s50, 1
          %s343 = scalar_lea.sflag [#allocation4], %s342
          %s344 = sand.u32 %s50, 1
          %s345 = smul.addr %s344, 16
          %s346 = scalar_lea.vmem [#allocation3], %s345
          %s347 = smul.u32 2, %s35
          %s348 = ssub.s32 3, %s347
          %p349 = scmp.lt.s32.totalorder %s348, 2
          %s350 = scalar_select %p349, %s348, 2
          %s351 = smul.u32 128, %s350
          %s353 = ssub.s32 256, %s351
          %354 = vsyncadd %s343, %s353
          %p355 = scmp.ne.s32.totalorder 0, %s351
          %s356 = smul.addr %s347, 128
          %s357 = scalar_lea.hbm %s0, %s356
          %s358 = smul.u32 8, %s350
          %s359 = sshll.u32 %s346, 4
          %s360 = int_to_ptr.vmem [resolvable:$true] %s359
          %s361 = sshll.u32 %s358, 4
          %365 = dma.hbm_to_vmem [thread:$0]  (%p355), %s357, %s361, %s360, %s343, 128, 128, 8
        $region44: #{tpu_custom_call.1} parent=39 // pred_fallthru
          _
        // Predicated region
        $region45: #{tpu_custom_call.1} parent=39 // pred_check
          %p366 = pneg %p88
        $region46: #{tpu_custom_call.1} parent=39 // pred_check_branch
          %368 = sbr.rel (%p366) target = $region48
        $region47: #{tpu_custom_call.1} parent=39 // pred_region
          %s369 = sand.u32 %s28, 1
          %s370 = scalar_lea.sflag [#allocation7], %s369
          %s371 = sand.u32 %s78, 1
          %s372 = smul.addr %s371, 16
          %s373 = scalar_lea.vmem [#allocation6], %s372
          %s374 = smul.u32 2, %s35
          %s375 = ssub.s32 3, %s374
          %p376 = scmp.lt.s32.totalorder %s375, 2
          %s377 = scalar_select %p376, %s375, 2
          %s378 = smul.u32 128, %s377
          %s380 = ssub.s32 256, %s378
          %381 = vsyncadd %s370, %s380
          %p382 = scmp.ne.s32.totalorder 0, %s378
          %s383 = smul.addr %s374, 3
          %s384 = sadd.s32 %s36, %s383
          %s385 = smul.addr %s384, 128
          %s386 = scalar_lea.hbm %s1, %s385
          %s387 = smul.u32 8, %s377
          %s388 = sshll.u32 %s373, 4
          %s389 = int_to_ptr.vmem [resolvable:$true] %s388
          %s390 = sshll.u32 %s387, 4
          %394 = dma.hbm_to_vmem [thread:$0]  (%p382), %s386, %s390, %s389, %s370, 384, 128, 8
        $region48: #{tpu_custom_call.1} parent=39 // pred_fallthru
          _
        // Predicated region
        $region49: #{tpu_custom_call.1} parent=39 // pred_check
          %p395 = pneg %p156
        $region50: #{tpu_custom_call.1} parent=39 // pred_check_branch
          %397 = sbr.rel (%p395) target = $region52
        $region51: #{tpu_custom_call.1} parent=39 // pred_region
          %s398 = sand.u32 %s28, 1
          %s399 = scalar_lea.sflag [#allocation10], %s398
          %s400 = sand.u32 %s146, 1
          %s401 = smul.addr %s400, 128
          %s402 = scalar_lea.vmem [#allocation9], %s401
          %s403 = smul.u32 16, %s36
          %s405 = ssub.s32 2048, 2048
          %406 = vsyncadd %s399, %s405
          %s407 = smul.addr %s403, 128
          %s408 = scalar_lea.hbm %s4, %s407
          %s409 = sshll.u32 %s402, 4
          %s410 = int_to_ptr.vmem [resolvable:$true] %s409
          %415 = dma.hbm_to_vmem [thread:$0]  %s408, 2048, %s410, %s399, 128, 128, 8
        $region52: #{tpu_custom_call.1} parent=39 // pred_fallthru
          _
      $region40: #{tpu_custom_call.1} parent=5 // pred_fallthru
        _
      %p416 = scmp.le.s32.totalorder 1, %s28
      %p417 = scmp.lt.s32.totalorder %s28, 7
      %p418 = pnand %p416, %p417
      %p419 = pneg %p418
      // Predicated region
      $region53: #{tpu_custom_call.1} parent=5 // pred_check
        _
      $region54: #{tpu_custom_call.1} parent=5 // pred_check_branch
        %421 = sbr.rel (%p418) target = $region56
      $region55: #{tpu_custom_call.1} parent=5 // pred_region
        %s422 = ssub.s32 %s28, 1
        %s423 = sand.u32 %s53, 1
        %s424 = scalar_lea.sflag [#allocation4], %s423
        %s425 = sand.u32 %s53, 1
        %s426 = smul.addr %s425, 16
        %s427 = scalar_lea.vmem [#allocation3], %s426
        // Predicated region
        $region57: #{tpu_custom_call.1} parent=55 // pred_check
          %p428 = pneg %p66
        $region58: #{tpu_custom_call.1} parent=55 // pred_check_branch
          %430 = sbr.rel (%p428) target = $region60
        $region59: #{tpu_custom_call.1} parent=55 // pred_region
          %431 = dma.done %s424, 256
        $region60: #{tpu_custom_call.1} parent=55 // pred_fallthru
          _
        %s432 = sand.u32 %s33, 1
        %s433 = scalar_lea.sflag [#allocation7], %s432
        %s434 = sand.u32 %s81, 1
        %s435 = smul.addr %s434, 16
        %s436 = scalar_lea.vmem [#allocation6], %s435
        // Predicated region
        $region61: #{tpu_custom_call.1} parent=55 // pred_check
          %p437 = pneg %p94
        $region62: #{tpu_custom_call.1} parent=55 // pred_check_branch
          %439 = sbr.rel (%p437) target = $region64
        $region63: #{tpu_custom_call.1} parent=55 // pred_region
          %440 = dma.done %s433, 256
        $region64: #{tpu_custom_call.1} parent=55 // pred_fallthru
          _
        // Predicated region
        $region65: #{tpu_custom_call.1} parent=55 // pred_check
          %p441 = pneg %p115
        $region66: #{tpu_custom_call.1} parent=55 // pred_check_branch
          %443 = sbr.rel (%p441) target = $region68
        $region67: #{tpu_custom_call.1} parent=55 // pred_region
          %444 = dma.done [#allocation7], 2048
        $region68: #{tpu_custom_call.1} parent=55 // pred_fallthru
          _
        %s445 = sand.u32 %s33, 1
        %s446 = scalar_lea.sflag [#allocation10], %s445
        %s447 = sand.u32 %s149, 1
        %s448 = smul.addr %s447, 128
        %s449 = scalar_lea.vmem [#allocation9], %s448
        // Predicated region
        $region69: #{tpu_custom_call.1} parent=55 // pred_check
          %p450 = pneg %p162
        $region70: #{tpu_custom_call.1} parent=55 // pred_check_branch
          %452 = sbr.rel (%p450) target = $region72
        $region71: #{tpu_custom_call.1} parent=55 // pred_region
          %453 = dma.done %s446, 2048
        $region72: #{tpu_custom_call.1} parent=55 // pred_fallthru
          _
        // Predicated region
        $region73: #{tpu_custom_call.1} parent=55 // pred_check
          %p454 = pneg %p204
        $region74: #{tpu_custom_call.1} parent=55 // pred_check_branch
          %456 = sbr.rel (%p454) target = $region76
        $region75: #{tpu_custom_call.1} parent=55 // pred_region
          %457 = dma.done [#allocation10], 2048
        $region76: #{tpu_custom_call.1} parent=55 // pred_fallthru
          _
        // Predicated region
        $region77: #{tpu_custom_call.1} parent=55 // pred_check
          %p458 = pneg %p225
        $region78: #{tpu_custom_call.1} parent=55 // pred_check_branch
          %460 = sbr.rel (%p458) target = $region80
        $region79: #{tpu_custom_call.1} parent=55 // pred_region
          %461 = dma.done [#allocation13], 2048
        $region80: #{tpu_custom_call.1} parent=55 // pred_fallthru
          _
        %s462 = sand.u32 %s53, 1
        %s463 = scalar_lea.sflag [#allocation4], %s462
        %s464 = sand.u32 %s53, 1
        %s465 = smul.addr %s464, 16
        %s466 = scalar_lea.vmem [#allocation3], %s465
        %p467 = pneg %p66
        %p468 = pneg %p63
        %s469 = sand.u32 %s33, 1
        %s470 = scalar_lea.sflag [#allocation7], %s469
        %s471 = sand.u32 %s81, 1
        %s472 = smul.addr %s471, 16
        %s473 = scalar_lea.vmem [#allocation6], %s472
        %p474 = pneg %p94
        %p475 = pneg %p91
        %p476 = pneg %p115
        %p477 = pneg %p112
        %p478 = pneg %p136
        %p479 = pneg %p133
        %s480 = sand.u32 %s33, 1
        %s481 = scalar_lea.sflag [#allocation10], %s480
        %s482 = sand.u32 %s149, 1
        %s483 = smul.addr %s482, 128
        %s484 = scalar_lea.vmem [#allocation9], %s483
        %p485 = pneg %p162
        %p486 = pneg %p159
        %p487 = pneg %p183
        %p488 = pneg %p180
        %p489 = pneg %p204
        %p490 = pneg %p201
        %p491 = pneg %p225
        %p492 = pneg %p222
        %p493 = pneg %p246
        %p494 = pneg %p243
        %p495 = pneg %p272
        %p496 = pneg %p269
        %s497 = sand.u32 %s259, 1
        %s498 = scalar_lea.sflag [#allocation5], %s497
        %s499 = sand.u32 %s259, 1
        %s500 = smul.addr %s499, 16
        %s501 = scalar_lea.vmem [#allocation14], %s500
        %s502 = smul.u32 2, %s37
        %s503 = ssub.s32 3, %s502
        %p504 = scmp.lt.s32.totalorder %s503, 2
        %s505 = scalar_select %p504, %s503, 2
        %s506 = smul.u32 128, %s505
        %s507 = smul.u32 2, %s37
        %s508 = ssub.s32 3, %s507
        %p509 = scmp.lt.s32.totalorder %s508, 2
        %s510 = scalar_select %p509, %s508, 2
        %s511 = smul.u32 128, %s510
        %s512 = smul.u32 16, %s38
        %s513 = smul.u32 2, %s37
        %s514 = ssub.s32 3, %s513
        %p515 = scmp.lt.s32.totalorder %s514, 2
        %s516 = scalar_select %p515, %s514, 2
        %s517 = smul.u32 128, %s516
        %p518 = scmp.eq.s32.totalorder %s38, 0
        // Predicated region
        $region81: #{tpu_custom_call.1} parent=55 // pred_check
          %p519 = pneg %p518
        $region82: #{tpu_custom_call.1} parent=55 // pred_check_branch
          %521 = sbr.rel (%p519) target = $region84
        $region83: #{tpu_custom_call.1} parent=55 // pred_region
          %522 = vst [vmem:[#allocation2] sm:$0xff] 0.0
          %523 = vst [vmem:[#allocation2 + $0x8] sm:$0xff] 0.0
        $region84: #{tpu_custom_call.1} parent=55 // pred_fallthru
          _
        %v524 = vld [vmem:[#allocation2] sm:$0xff]
        %v525 = vld [vmem:[#allocation2 + $0x8] sm:$0xff]
        %v526 = vld [vmem:[%s436] sm:$0xff]
        %v527 = vld [vmem:[%s436 + $0x8] sm:$0xff]
        %v528 = vld [vmem:[%s449] sm:$0xff]
        %v529 = vld [vmem:[%s449 + $0x8] sm:$0xff]
        %v530 = vld [vmem:[%s449 + $0x10] sm:$0xff]
        %v531 = vld [vmem:[%s449 + $0x18] sm:$0xff]
        %v532 = vld [vmem:[%s449 + $0x20] sm:$0xff]
        %v533 = vld [vmem:[%s449 + $0x28] sm:$0xff]
        %v534 = vld [vmem:[%s449 + $0x30] sm:$0xff]
        %v535 = vld [vmem:[%s449 + $0x38] sm:$0xff]
        %v536 = vld [vmem:[%s449 + $0x40] sm:$0xff]
        %v537 = vld [vmem:[%s449 + $0x48] sm:$0xff]
        %v538 = vld [vmem:[%s449 + $0x50] sm:$0xff]
        %v539 = vld [vmem:[%s449 + $0x58] sm:$0xff]
        %v540 = vld [vmem:[%s449 + $0x60] sm:$0xff]
        %v541 = vld [vmem:[%s449 + $0x68] sm:$0xff]
        %v542 = vld [vmem:[%s449 + $0x70] sm:$0xff]
        %v543 = vld [vmem:[%s449 + $0x78] sm:$0xff]
        %544 = vmatprep.subr.mxu0 0.0
        %545 = vmatpush1.msra.mxu0 %v528
        %546 = vmatprep.subr.mxu0 0.0
        %547 = vmatpush1.msra.mxu0 %v529
        %548 = vmatprep.subr.mxu0 0.0
        %549 = vmatpush1.msra.mxu0 %v530
        %550 = vmatprep.subr.mxu0 0.0
        %551 = vmatpush1.msra.mxu0 %v531
        %552 = vmatprep.subr.mxu0 0.0
        %553 = vmatpush1.msra.mxu0 %v532
        %554 = vmatprep.subr.mxu0 0.0
        %555 = vmatpush1.msra.mxu0 %v533
        %556 = vmatprep.subr.mxu0 0.0
        %557 = vmatpush1.msra.mxu0 %v534
        %558 = vmatprep.subr.mxu0 0.0
        %559 = vmatpush1.msra.mxu0 %v535
        %560 = vmatprep.subr.mxu0 0.0
        %561 = vmatpush1.msra.mxu0 %v536
        %562 = vmatprep.subr.mxu0 0.0
        %563 = vmatpush1.msra.mxu0 %v537
        %564 = vmatprep.subr.mxu0 0.0
        %565 = vmatpush1.msra.mxu0 %v538
        %566 = vmatprep.subr.mxu0 0.0
        %567 = vmatpush1.msra.mxu0 %v539
        %568 = vmatprep.subr.mxu0 0.0
        %569 = vmatpush1.msra.mxu0 %v540
        %570 = vmatprep.subr.mxu0 0.0
        %571 = vmatpush1.msra.mxu0 %v541
        %572 = vmatprep.subr.mxu0 0.0
        %573 = vmatpush1.msra.mxu0 %v542
        %574 = vmatprep.subr.mxu0 0.0
        %575 = vmatpush1.msra.mxu0 %v543
        %576 = vmatprep.subr.mxu0 0.0
        %577 = vmatpush1.msra.mxu0 0.0
        %578 = vmatprep.subr.mxu0 0.0
        %579 = vmatpush1.msra.mxu0 0.0
        %580 = vmatprep.subr.mxu0 0.0
        %581 = vmatpush1.msra.mxu0 0.0
        %582 = vmatprep.subr.mxu0 0.0
        %583 = vmatpush1.msra.mxu0 0.0
        %584 = vmatprep.subr.mxu0 0.0
        %585 = vmatpush1.msra.mxu0 0.0
        %586 = vmatprep.subr.mxu0 0.0
        %587 = vmatpush1.msra.mxu0 0.0
        %588 = vmatprep.subr.mxu0 0.0
        %589 = vmatpush1.msra.mxu0 0.0
        %590 = vmatprep.subr.mxu0 0.0
        %591 = vmatpush1.msra.mxu0 0.0
        %592 = vmatprep.subr.mxu0 0.0
        %593 = vmatpush1.msra.mxu0 0.0
        %594 = vmatprep.subr.mxu0 0.0
        %595 = vmatpush1.msra.mxu0 0.0
        %596 = vmatprep.subr.mxu0 0.0
        %597 = vmatpush1.msra.mxu0 0.0
        %598 = vmatprep.subr.mxu0 0.0
        %599 = vmatpush1.msra.mxu0 0.0
        %600 = vmatprep.subr.mxu0 0.0
        %601 = vmatpush1.msra.mxu0 0.0
        %602 = vmatprep.subr.mxu0 0.0
        %603 = vmatpush1.msra.mxu0 0.0
        %604 = vmatprep.subr.mxu0 0.0
        %605 = vmatpush1.msra.mxu0 0.0
        %606 = vmatprep.subr.mxu0 0.0
        %607 = vmatpush1.msra.mxu0 0.0
        %608 = vmatprep.mubr.f32.mxu0 0.0
        %609 = vmatmul.mubr.f32.gmra.mrb[0].mxu0 %v526
        %v610 = vpop.f32.mrb[0].mxu0
        %v611 = vadd.f32 0.0, %v610
        %v612 = vpop.f32.mrb[0].mxu0
        %613 = vmatprep.mubr.f32.mxu0 0.0
        %614 = vmatmul.mubr.f32.gmra.mrb[0].mxu0 %v527
        %v615 = vpop.f32.mrb[0].mxu0
        %v616 = vadd.f32 0.0, %v615
        %v617 = vpop.f32.mrb[0].mxu0
        %618 = vdwg.mxu0
        %v619 = vadd.f32 %v524, %v611
        %v620 = vadd.f32 %v525, %v616
        %621 = vst [vmem:[#allocation2] sm:$0xff] %v619
        %622 = vst [vmem:[#allocation2 + $0x8] sm:$0xff] %v620
        %p623 = scmp.eq.s32.totalorder %s38, 2
        // Predicated region
        $region85: #{tpu_custom_call.1} parent=55 // pred_check
          %p624 = pneg %p623
        $region86: #{tpu_custom_call.1} parent=55 // pred_check_branch
          %626 = sbr.rel (%p624) target = $region88
        $region87: #{tpu_custom_call.1} parent=55 // pred_region
          %v627 = vld [vmem:[%s427] sm:$0xff]
          %v628 = vld [vmem:[%s427 + $0x8] sm:$0xff]
          %v629 = vld [vmem:[#allocation8] sm:$0xff]
          %v630 = vld [vmem:[#allocation8 + $0x8] sm:$0xff]
          %v631 = vld [vmem:[#allocation8 + $0x10] sm:$0xff]
          %v632 = vld [vmem:[#allocation8 + $0x18] sm:$0xff]
          %v633 = vld [vmem:[#allocation8 + $0x20] sm:$0xff]
          %v634 = vld [vmem:[#allocation8 + $0x28] sm:$0xff]
          %v635 = vld [vmem:[#allocation8 + $0x30] sm:$0xff]
          %v636 = vld [vmem:[#allocation8 + $0x38] sm:$0xff]
          %v637 = vld [vmem:[#allocation8 + $0x40] sm:$0xff]
          %v638 = vld [vmem:[#allocation8 + $0x48] sm:$0xff]
          %v639 = vld [vmem:[#allocation8 + $0x50] sm:$0xff]
          %v640 = vld [vmem:[#allocation8 + $0x58] sm:$0xff]
          %v641 = vld [vmem:[#allocation8 + $0x60] sm:$0xff]
          %v642 = vld [vmem:[#allocation8 + $0x68] sm:$0xff]
          %v643 = vld [vmem:[#allocation8 + $0x70] sm:$0xff]
          %v644 = vld [vmem:[#allocation8 + $0x78] sm:$0xff]
          %v645 = vld [vmem:[%s3] sm:$0x1]
          %v647 = vlaneseq
          %v648 = vshrl.u32 %v647, 7
          %v649 = vsub.s32 0, %v648
          %v650 = vrot.slane %v645, %v649
          %652 = vmatprep.subr.mxu0 0.0
          %653 = vmatpush1.msra.mxu0 %v629
          %654 = vmatprep.subr.mxu0 0.0
          %655 = vmatpush1.msra.mxu0 %v630
          %656 = vmatprep.subr.mxu0 0.0
          %657 = vmatpush1.msra.mxu0 %v631
          %658 = vmatprep.subr.mxu0 0.0
          %659 = vmatpush1.msra.mxu0 %v632
          %660 = vmatprep.subr.mxu0 0.0
          %661 = vmatpush1.msra.mxu0 %v633
          %662 = vmatprep.subr.mxu0 0.0
          %663 = vmatpush1.msra.mxu0 %v634
          %664 = vmatprep.subr.mxu0 0.0
          %665 = vmatpush1.msra.mxu0 %v635
          %666 = vmatprep.subr.mxu0 0.0
          %667 = vmatpush1.msra.mxu0 %v636
          %668 = vmatprep.subr.mxu0 0.0
          %669 = vmatpush1.msra.mxu0 %v637
          %670 = vmatprep.subr.mxu0 0.0
          %671 = vmatpush1.msra.mxu0 %v638
          %672 = vmatprep.subr.mxu0 0.0
          %673 = vmatpush1.msra.mxu0 %v639
          %674 = vmatprep.subr.mxu0 0.0
          %675 = vmatpush1.msra.mxu0 %v640
          %676 = vmatprep.subr.mxu0 0.0
          %677 = vmatpush1.msra.mxu0 %v641
          %678 = vmatprep.subr.mxu0 0.0
          %679 = vmatpush1.msra.mxu0 %v642
          %680 = vmatprep.subr.mxu0 0.0
          %681 = vmatpush1.msra.mxu0 %v643
          %682 = vmatprep.subr.mxu0 0.0
          %683 = vmatpush1.msra.mxu0 %v644
          %684 = vmatprep.subr.mxu0 0.0
          %685 = vmatpush1.msra.mxu0 0.0
          %686 = vmatprep.subr.mxu0 0.0
          %687 = vmatpush1.msra.mxu0 0.0
          %688 = vmatprep.subr.mxu0 0.0
          %689 = vmatpush1.msra.mxu0 0.0
          %690 = vmatprep.subr.mxu0 0.0
          %691 = vmatpush1.msra.mxu0 0.0
          %692 = vmatprep.subr.mxu0 0.0
          %693 = vmatpush1.msra.mxu0 0.0
          %694 = vmatprep.subr.mxu0 0.0
          %695 = vmatpush1.msra.mxu0 0.0
          %696 = vmatprep.subr.mxu0 0.0
          %697 = vmatpush1.msra.mxu0 0.0
          %698 = vmatprep.subr.mxu0 0.0
          %699 = vmatpush1.msra.mxu0 0.0
          %700 = vmatprep.subr.mxu0 0.0
          %701 = vmatpush1.msra.mxu0 0.0
          %702 = vmatprep.subr.mxu0 0.0
          %703 = vmatpush1.msra.mxu0 0.0
          %704 = vmatprep.subr.mxu0 0.0
          %705 = vmatpush1.msra.mxu0 0.0
          %706 = vmatprep.subr.mxu0 0.0
          %707 = vmatpush1.msra.mxu0 0.0
          %708 = vmatprep.subr.mxu0 0.0
          %709 = vmatpush1.msra.mxu0 0.0
          %710 = vmatprep.subr.mxu0 0.0
          %711 = vmatpush1.msra.mxu0 0.0
          %712 = vmatprep.subr.mxu0 0.0
          %713 = vmatpush1.msra.mxu0 0.0
          %714 = vmatprep.subr.mxu0 0.0
          %715 = vmatpush1.msra.mxu0 0.0
          %716 = vmatprep.mubr.f32.mxu0 0.0
          %717 = vmatmul.mubr.f32.gmra.mrb[0].mxu0 %v627
          %v718 = vpop.f32.mrb[0].mxu0
          %v719 = vadd.f32 %v650, %v718
          %v720 = vpop.f32.mrb[0].mxu0
          %721 = vmatprep.mubr.f32.mxu0 0.0
          %722 = vmatmul.mubr.f32.gmra.mrb[0].mxu0 %v628
          %v723 = vpop.f32.mrb[0].mxu0
          %v724 = vadd.f32 %v650, %v723
          %v725 = vpop.f32.mrb[0].mxu0
          %726 = vdwg.mxu0
          %v727 = vld [vmem:[#allocation2] sm:$0xff]
          %v728 = vld [vmem:[#allocation2 + $0x8] sm:$0xff]
          %v729 = vld [vmem:[%s5] sm:$0x1]
          %v731 = vlaneseq
          %v732 = vshrl.u32 %v731, 7
          %v733 = vsub.s32 0, %v732
          %v734 = vrot.slane %v729, %v733
          %v736 = vadd.f32 %v727, %v734
          %v737 = vadd.f32 %v728, %v734
          %v738 = vld [vmem:[#allocation11] sm:$0xff]
          %v739 = vld [vmem:[#allocation11 + $0x8] sm:$0xff]
          %v740 = vld [vmem:[#allocation11 + $0x10] sm:$0xff]
          %v741 = vld [vmem:[#allocation11 + $0x18] sm:$0xff]
          %v742 = vld [vmem:[#allocation11 + $0x20] sm:$0xff]
          %v743 = vld [vmem:[#allocation11 + $0x28] sm:$0xff]
          %v744 = vld [vmem:[#allocation11 + $0x30] sm:$0xff]
          %v745 = vld [vmem:[#allocation11 + $0x38] sm:$0xff]
          %v746 = vld [vmem:[#allocation11 + $0x40] sm:$0xff]
          %v747 = vld [vmem:[#allocation11 + $0x48] sm:$0xff]
          %v748 = vld [vmem:[#allocation11 + $0x50] sm:$0xff]
          %v749 = vld [vmem:[#allocation11 + $0x58] sm:$0xff]
          %v750 = vld [vmem:[#allocation11 + $0x60] sm:$0xff]
          %v751 = vld [vmem:[#allocation11 + $0x68] sm:$0xff]
          %v752 = vld [vmem:[#allocation11 + $0x70] sm:$0xff]
          %v753 = vld [vmem:[#allocation11 + $0x78] sm:$0xff]
          %v754 = vld [vmem:[#allocation12] sm:$0xff]
          %v755 = vld [vmem:[#allocation12 + $0x8] sm:$0xff]
          %v756 = vld [vmem:[#allocation12 + $0x10] sm:$0xff]
          %v757 = vld [vmem:[#allocation12 + $0x18] sm:$0xff]
          %v758 = vld [vmem:[#allocation12 + $0x20] sm:$0xff]
          %v759 = vld [vmem:[#allocation12 + $0x28] sm:$0xff]
          %v760 = vld [vmem:[#allocation12 + $0x30] sm:$0xff]
          %v761 = vld [vmem:[#allocation12 + $0x38] sm:$0xff]
          %v762 = vld [vmem:[#allocation12 + $0x40] sm:$0xff]
          %v763 = vld [vmem:[#allocation12 + $0x48] sm:$0xff]
          %v764 = vld [vmem:[#allocation12 + $0x50] sm:$0xff]
          %v765 = vld [vmem:[#allocation12 + $0x58] sm:$0xff]
          %v766 = vld [vmem:[#allocation12 + $0x60] sm:$0xff]
          %v767 = vld [vmem:[#allocation12 + $0x68] sm:$0xff]
          %v768 = vld [vmem:[#allocation12 + $0x70] sm:$0xff]
          %v769 = vld [vmem:[#allocation12 + $0x78] sm:$0xff]
          %770 = vmatprep.subr.mxu0 0.0
          %771 = vmatpush1.msra.mxu0 %v754
          %772 = vmatprep.subr.mxu0 0.0
          %773 = vmatpush1.msra.mxu0 %v755
          %774 = vmatprep.subr.mxu0 0.0
          %775 = vmatpush1.msra.mxu0 %v756
          %776 = vmatprep.subr.mxu0 0.0
          %777 = vmatpush1.msra.mxu0 %v757
          %778 = vmatprep.subr.mxu0 0.0
          %779 = vmatpush1.msra.mxu0 %v758
          %780 = vmatprep.subr.mxu0 0.0
          %781 = vmatpush1.msra.mxu0 %v759
          %782 = vmatprep.subr.mxu0 0.0
          %783 = vmatpush1.msra.mxu0 %v760
          %784 = vmatprep.subr.mxu0 0.0
          %785 = vmatpush1.msra.mxu0 %v761
          %786 = vmatprep.subr.mxu0 0.0
          %787 = vmatpush1.msra.mxu0 %v762
          %788 = vmatprep.subr.mxu0 0.0
          %789 = vmatpush1.msra.mxu0 %v763
          %790 = vmatprep.subr.mxu0 0.0
          %791 = vmatpush1.msra.mxu0 %v764
          %792 = vmatprep.subr.mxu0 0.0
          %793 = vmatpush1.msra.mxu0 %v765
          %794 = vmatprep.subr.mxu0 0.0
          %795 = vmatpush1.msra.mxu0 %v766
          %796 = vmatprep.subr.mxu0 0.0
          %797 = vmatpush1.msra.mxu0 %v767
          %798 = vmatprep.subr.mxu0 0.0
          %799 = vmatpush1.msra.mxu0 %v768
          %800 = vmatprep.subr.mxu0 0.0
          %801 = vmatpush1.msra.mxu0 %v769
          %802 = vmatprep.subr.mxu0 0.0
          %803 = vmatpush1.msra.mxu0 0.0
          %804 = vmatprep.subr.mxu0 0.0
          %805 = vmatpush1.msra.mxu0 0.0
          %806 = vmatprep.subr.mxu0 0.0
          %807 = vmatpush1.msra.mxu0 0.0
          %808 = vmatprep.subr.mxu0 0.0
          %809 = vmatpush1.msra.mxu0 0.0
          %810 = vmatprep.subr.mxu0 0.0
          %811 = vmatpush1.msra.mxu0 0.0
          %812 = vmatprep.subr.mxu0 0.0
          %813 = vmatpush1.msra.mxu0 0.0
          %814 = vmatprep.subr.mxu0 0.0
          %815 = vmatpush1.msra.mxu0 0.0
          %816 = vmatprep.subr.mxu0 0.0
          %817 = vmatpush1.msra.mxu0 0.0
          %818 = vmatprep.subr.mxu0 0.0
          %819 = vmatpush1.msra.mxu0 0.0
          %820 = vmatprep.subr.mxu0 0.0
          %821 = vmatpush1.msra.mxu0 0.0
          %822 = vmatprep.subr.mxu0 0.0
          %823 = vmatpush1.msra.mxu0 0.0
          %824 = vmatprep.subr.mxu0 0.0
          %825 = vmatpush1.msra.mxu0 0.0
          %826 = vmatprep.subr.mxu0 0.0
          %827 = vmatpush1.msra.mxu0 0.0
          %828 = vmatprep.subr.mxu0 0.0
          %829 = vmatpush1.msra.mxu0 0.0
          %830 = vmatprep.subr.mxu0 0.0
          %831 = vmatpush1.msra.mxu0 0.0
          %832 = vmatprep.subr.mxu0 0.0
          %833 = vmatpush1.msra.mxu0 0.0
          %834 = vmatprep.mubr.f32.mxu0 0.0
          %835 = vmatmul.mubr.f32.gmra.mrb[0].mxu0 %v736
          %v836 = vpop.f32.mrb[0].mxu0
          %v837 = vadd.f32 0.0, %v836
          %v838 = vpop.f32.mrb[0].mxu0
          %839 = vmatprep.mubr.f32.mxu0 0.0
          %840 = vmatmul.mubr.f32.gmra.mrb[0].mxu0 %v737
          %v841 = vpop.f32.mrb[0].mxu0
          %v842 = vadd.f32 0.0, %v841
          %v843 = vpop.f32.mrb[0].mxu0
          %844 = vdwg.mxu0
          %845 = vmatprep.subr.mxu0 0.0
          %846 = vmatpush1.msra.mxu0 %v738
          %847 = vmatprep.subr.mxu0 0.0
          %848 = vmatpush1.msra.mxu0 %v739
          %849 = vmatprep.subr.mxu0 0.0
          %850 = vmatpush1.msra.mxu0 %v740
          %851 = vmatprep.subr.mxu0 0.0
          %852 = vmatpush1.msra.mxu0 %v741
          %853 = vmatprep.subr.mxu0 0.0
          %854 = vmatpush1.msra.mxu0 %v742
          %855 = vmatprep.subr.mxu0 0.0
          %856 = vmatpush1.msra.mxu0 %v743
          %857 = vmatprep.subr.mxu0 0.0
          %858 = vmatpush1.msra.mxu0 %v744
          %859 = vmatprep.subr.mxu0 0.0
          %860 = vmatpush1.msra.mxu0 %v745
          %861 = vmatprep.subr.mxu0 0.0
          %862 = vmatpush1.msra.mxu0 %v746
          %863 = vmatprep.subr.mxu0 0.0
          %864 = vmatpush1.msra.mxu0 %v747
          %865 = vmatprep.subr.mxu0 0.0
          %866 = vmatpush1.msra.mxu0 %v748
          %867 = vmatprep.subr.mxu0 0.0
          %868 = vmatpush1.msra.mxu0 %v749
          %869 = vmatprep.subr.mxu0 0.0
          %870 = vmatpush1.msra.mxu0 %v750
          %871 = vmatprep.subr.mxu0 0.0
          %872 = vmatpush1.msra.mxu0 %v751
          %873 = vmatprep.subr.mxu0 0.0
          %874 = vmatpush1.msra.mxu0 %v752
          %875 = vmatprep.subr.mxu0 0.0
          %876 = vmatpush1.msra.mxu0 %v753
          %877 = vmatprep.subr.mxu0 0.0
          %878 = vmatpush1.msra.mxu0 0.0
          %879 = vmatprep.subr.mxu0 0.0
          %880 = vmatpush1.msra.mxu0 0.0
          %881 = vmatprep.subr.mxu0 0.0
          %882 = vmatpush1.msra.mxu0 0.0
          %883 = vmatprep.subr.mxu0 0.0
          %884 = vmatpush1.msra.mxu0 0.0
          %885 = vmatprep.subr.mxu0 0.0
          %886 = vmatpush1.msra.mxu0 0.0
          %887 = vmatprep.subr.mxu0 0.0
          %888 = vmatpush1.msra.mxu0 0.0
          %889 = vmatprep.subr.mxu0 0.0
          %890 = vmatpush1.msra.mxu0 0.0
          %891 = vmatprep.subr.mxu0 0.0
          %892 = vmatpush1.msra.mxu0 0.0
          %893 = vmatprep.subr.mxu0 0.0
          %894 = vmatpush1.msra.mxu0 0.0
          %895 = vmatprep.subr.mxu0 0.0
          %896 = vmatpush1.msra.mxu0 0.0
          %897 = vmatprep.subr.mxu0 0.0
          %898 = vmatpush1.msra.mxu0 0.0
          %899 = vmatprep.subr.mxu0 0.0
          %900 = vmatpush1.msra.mxu0 0.0
          %901 = vmatprep.subr.mxu0 0.0
          %902 = vmatpush1.msra.mxu0 0.0
          %903 = vmatprep.subr.mxu0 0.0
          %904 = vmatpush1.msra.mxu0 0.0
          %905 = vmatprep.subr.mxu0 0.0
          %906 = vmatpush1.msra.mxu0 0.0
          %907 = vmatprep.subr.mxu0 0.0
          %908 = vmatpush1.msra.mxu0 0.0
          %909 = vmatprep.mubr.f32.mxu0 0.0
          %910 = vmatmul.mubr.f32.gmra.mrb[0].mxu0 %v719
          %v911 = vpop.f32.mrb[0].mxu0
          %v912 = vadd.f32 %v837, %v911
          %v913 = vpop.f32.mrb[0].mxu0
          %914 = vmatprep.mubr.f32.mxu0 0.0
          %915 = vmatmul.mubr.f32.gmra.mrb[0].mxu0 %v724
          %v916 = vpop.f32.mrb[0].mxu0
          %v917 = vadd.f32 %v842, %v916
          %v918 = vpop.f32.mrb[0].mxu0
          %919 = vdwg.mxu0
          %v920 = vld [vmem:[%s8] sm:$0x1]
          %v922 = vlaneseq
          %v923 = vshrl.u32 %v922, 7
          %v924 = vsub.s32 0, %v923
          %v925 = vrot.slane %v920, %v924
          %v927 = vadd.f32 %v912, %v925
          %v928 = vadd.f32 %v917, %v925
          %929 = vst [vmem:[%s501] sm:$0xff] %v927
          %930 = vst [vmem:[%s501 + $0x8] sm:$0xff] %v928
        $region88: #{tpu_custom_call.1} parent=55 // pred_fallthru
          _
        %s931 = sand.u32 %s259, 1
        %s932 = scalar_lea.sflag [#allocation5], %s931
        %s933 = sand.u32 %s259, 1
        %s934 = smul.addr %s933, 16
        %s935 = scalar_lea.vmem [#allocation14], %s934
        // Predicated region
        $region89: #{tpu_custom_call.1} parent=55 // pred_check
          %p936 = pneg %p269
        $region90: #{tpu_custom_call.1} parent=55 // pred_check_branch
          %938 = sbr.rel (%p936) target = $region92
        $region91: #{tpu_custom_call.1} parent=55 // pred_region
          %s939 = smul.u32 2, %s37
          %s940 = ssub.s32 3, %s939
          %p941 = scmp.lt.s32.totalorder %s940, 2
          %s942 = scalar_select %p941, %s940, 2
          %s943 = smul.u32 128, %s942
          %s945 = ssub.s32 256, %s943
          %946 = vsyncadd %s932, %s945
          %p947 = scmp.ne.s32.totalorder 0, %s943
          %s948 = smul.addr %s939, 128
          %s949 = scalar_lea.hbm %s9, %s948
          %s950 = smul.u32 8, %s942
          %s951 = sshll.u32 %s935, 4
          %s952 = int_to_ptr.vmem [resolvable:$true] %s951
          %s953 = sshll.u32 %s950, 4
          %957 = dma.vmem_to_hbm [thread:$0]  (%p947), %s952, %s953, %s949, %s932, 128, 128, 8
        $region92: #{tpu_custom_call.1} parent=55 // pred_fallthru
          _
      $region56: #{tpu_custom_call.1} parent=5 // pred_fallthru
        _
      %p958 = scmp.le.s32.totalorder 2, %s28
      // Predicated region
      $region93: #{tpu_custom_call.1} parent=5 // pred_check
        %p959 = pneg %p958
      $region94: #{tpu_custom_call.1} parent=5 // pred_check_branch
        %961 = sbr.rel (%p959) target = $region96
      $region95: #{tpu_custom_call.1} parent=5 // pred_region
        %s962 = ssub.s32 %s28, 2
        // Predicated region
        $region97: #{tpu_custom_call.1} parent=95 // pred_check
          %p963 = pneg %p275
        $region98: #{tpu_custom_call.1} parent=95 // pred_check_branch
          %965 = sbr.rel (%p963) target = $region100
        $region99: #{tpu_custom_call.1} parent=95 // pred_region
          %s966 = sand.u32 %s260, 1
          %s967 = scalar_lea.sflag [#allocation5], %s966
          %s968 = sand.u32 %s260, 1
          %s969 = smul.addr %s968, 16
          %s970 = scalar_lea.vmem [#allocation14], %s969
          %971 = dma.done %s967, 256
        $region100: #{tpu_custom_call.1} parent=95 // pred_fallthru
          _
      $region96: #{tpu_custom_call.1} parent=5 // pred_fallthru
        _
    $region6: #{tpu_custom_call.1} parent=1 // loop_footer
      %s32 = sadd.s32 1, %s28
    $region7: #{tpu_custom_call.1} parent=1 // loop_footer_branch
      %27 = sbr.rel target = $region3
    $region8: #{tpu_custom_call.1} parent=1 // loop_exit
      _
    %972 = vsyncpa [#allocation4], 1
    %s973 = scalar_lea.sflag [#allocation4], 1
    %974 = vsyncpa %s973, 1
    %975 = vsyncpa [#allocation7], 1
    %s976 = scalar_lea.sflag [#allocation7], 1
    %977 = vsyncpa %s976, 1
    %978 = vsyncpa [#allocation10], 1
    %s979 = scalar_lea.sflag [#allocation10], 1
    %980 = vsyncpa %s979, 1
    %981 = vsyncpa [#allocation13], 1
    %982 = vsyncpa [#allocation5], 1
    %s983 = scalar_lea.sflag [#allocation5], 1
    %984 = vsyncpa %s983, 1

// kernel: tpu_custom_call.1
$region0: #{tpu_custom_call.1}
  #allocation0 [shape = 'u32[]', space=smem, size = 0x4, offset = 0x4, fixed_abs, tag = 'smem constant byte address 0x4 - core index']
  #allocation1 [shape = 'u32[144,128]{1,0:T(1,128)}', space=vmem, size = 0x12000, scoped, tag = 'internal scratch']
  #allocation2 [shape = 'f32[16,128]{1,0:T(8,128)}', space=vmem, size = 0x2000, scoped, tag = 'scratch operand']
  %s0 = inlined_call_operand.hbm [shape: f32[24,128], index: 0, kind: input, shape index: {}]
  %s1 = inlined_call_operand.hbm [shape: f32[24,384], index: 1, kind: input, shape index: {}]
  %s2 = inlined_call_operand.hbm [shape: f32[128,128], index: 2, kind: input, shape index: {}]
  %s3 = inlined_call_operand.vmem [shape: f32[1,128], index: 3, kind: input, shape index: {}]
  %s4 = inlined_call_operand.hbm [shape: f32[384,128], index: 4, kind: input, shape index: {}]
  %s5 = inlined_call_operand.vmem [shape: f32[1,128], index: 5, kind: input, shape index: {}]
  %s6 = inlined_call_operand.hbm [shape: f32[128,128], index: 6, kind: input, shape index: {}]
  %s7 = inlined_call_operand.hbm [shape: f32[128,128], index: 7, kind: input, shape index: {}]
  %s8 = inlined_call_operand.vmem [shape: f32[1,128], index: 8, kind: input, shape index: {}]
  %s9 = inlined_call_operand.hbm [shape: f32[24,128], index: 9, kind: output, shape index: {}]
  %s10 = sld [smem:[#allocation0]]
  $region101: #{tpu_custom_call.1} parent=0
    _
  %s12 = ssub.s32 1, %s10
  %s13 = scalar_select 0, %s12, %s10
  $region1: #{tpu_custom_call.1} parent=0
    #allocation3 [shape = 'u8[16384]{0}', space=vmem, size = 0x4000, scoped, tag = 'input window, operand 0']
    #allocation4 [shape = 's32[2]{0}', space=sflag, size = 0x8, scoped, tag = 'scoped memory for tpu_custom_call.1']
    #allocation5 [shape = 's32[2]{0}', space=sflag, size = 0x8, scoped, tag = 'scoped memory for tpu_custom_call.1']
    #allocation6 [shape = 'u8[16384]{0}', space=vmem, size = 0x4000, scoped, tag = 'input window, operand 1']
    #allocation7 [shape = 's32[2]{0}', space=sflag, size = 0x8, scoped, tag = 'scoped memory for tpu_custom_call.1']
    #allocation8 [shape = 'u8[65536]{0}', space=vmem, size = 0x10000, scoped, tag = 'input window, operand 2, single buffered']
    #allocation9 [shape = 'u8[131072]{0}', space=vmem, size = 0x20000, scoped, tag = 'input window, operand 4']
    #allocation10 [shape = 's32[2]{0}', space=sflag, size = 0x8, scoped, tag = 'scoped memory for tpu_custom_call.1']
    #allocation11 [shape = 'u8[65536]{0}', space=vmem, size = 0x10000, scoped, tag = 'input window, operand 6, single buffered']
    #allocation12 [shape = 'u8[65536]{0}', space=vmem, size = 0x10000, scoped, tag = 'input window, operand 7, single buffered']
    #allocation13 [shape = 's32[1]{0}', space=sflag, size = 0x4, scoped, tag = 'scoped memory for tpu_custom_call.1']
    #allocation14 [shape = 'u8[16384]{0}', space=vmem, size = 0x4000, scoped, tag = 'output window, operand 0']
    %14 = vsyncpa [#allocation4], 0
    %s15 = scalar_lea.sflag [#allocation4], 1
    %16 = vsyncpa %s15, 0
    %17 = vsyncpa [#allocation7], 0
    %s18 = scalar_lea.sflag [#allocation7], 1
    %19 = vsyncpa %s18, 0
    %20 = vsyncpa [#allocation10], 0
    %s21 = scalar_lea.sflag [#allocation10], 1
    %22 = vsyncpa %s21, 0
    %23 = vsyncpa [#allocation13], 0
    %24 = vsyncpa [#allocation5], 0
    %s25 = scalar_lea.sflag [#allocation5], 1
    %26 = vsyncpa %s25, 0
    loop: start=0, step=1, limit=8
    $region2: #{tpu_custom_call.1} parent=1 // loop_pre_header
      _
    $region3: #{tpu_custom_call.1} parent=1 // loop_header
      %s28 = sphi 0, %s32
      %p29 = scmp.ge.s32.totalorder %s28, 8
      %s35 = sphi 0, %s47
      %s36 = sphi 0, %s43
      %s37 = sphi 0, %s35
      %s38 = sphi 0, %s36
      %s39 = sphi 0, %s37
      %s40 = sphi 0, %s38
      %s50 = sphi 0, %s52
      %s53 = sphi 0, %s50
      %s54 = sphi 0, %s53
      %s70 = sphi 0, %s54
      %s78 = sphi 0, %s80
      %s81 = sphi 0, %s78
      %s82 = sphi 0, %s81
      %s98 = sphi 0, %s82
      %s102 = sphi 0, %s102
      %s104 = sphi 0, %s102
      %s105 = sphi 0, %s104
      %s119 = sphi 0, %s105
      %s123 = sphi 0, %s123
      %s125 = sphi 0, %s123
      %s126 = sphi 0, %s125
      %s140 = sphi 0, %s126
      %s146 = sphi 0, %s148
      %s149 = sphi 0, %s146
      %s150 = sphi 0, %s149
      %s166 = sphi 0, %s150
      %s170 = sphi 0, %s170
      %s172 = sphi 0, %s170
      %s173 = sphi 0, %s172
      %s187 = sphi 0, %s173
      %s191 = sphi 0, %s191
      %s193 = sphi 0, %s191
      %s194 = sphi 0, %s193
      %s208 = sphi 0, %s194
      %s212 = sphi 0, %s212
      %s214 = sphi 0, %s212
      %s215 = sphi 0, %s214
      %s229 = sphi 0, %s215
      %s233 = sphi 0, %s233
      %s235 = sphi 0, %s233
      %s236 = sphi 0, %s235
      %s250 = sphi 0, %s236
      %s256 = sphi 0, %s258
      %s259 = sphi 0, %s256
      %s260 = sphi 0, %s259
      %s276 = sphi 0, %s260
    $region4: #{tpu_custom_call.1} parent=1 // loop_header_branch
      %31 = sbr.rel (%p29) target = $region8
    $region5: #{tpu_custom_call.1} parent=1 // loop_body
      %s33 = ssub.s32 %s28, 1
      %s34 = ssub.s32 %s28, 2
      %s41 = sadd.s32 1, %s36
      %p42 = scmp.ge.s32.totalorder %s41, 3
      %s43 = scalar_select %p42, 0, %s41
      %s44 = sadd.s32 1, %s35
      %s45 = scalar_select %p42, %s44, %s35
      %p46 = scmp.ge.s32.totalorder %s45, 2
      %s47 = scalar_select %p46, 0, %s45
      %s48 = ssub.s32 %s35, %s47
      %p49 = scmp.eq.s32.totalorder %s48, 0
      %s51 = sadd.s32 %s50, 1
      %s52 = scalar_select %p49, %s50, %s51
      %p55 = pneg %p49
      %p56 = scmp.eq.s32.totalorder %s28, 5
      %p57 = por %p55, %p56
      %p58 = scmp.ne.s32.totalorder %s50, %s53
      %p59 = scmp.eq.s32.totalorder %s28, 0
      %p60 = por %p58, %p59
      %p61 = scmp.ne.s32.totalorder %s50, %s53
      %p62 = scmp.eq.s32.totalorder %s33, 5
      %p63 = por %p61, %p62
      %p64 = scmp.ne.s32.totalorder %s53, %s54
      %p65 = scmp.eq.s32.totalorder %s33, 0
      %p66 = por %p64, %p65
      %p67 = scmp.ne.s32.totalorder %s53, %s54
      %p68 = scmp.eq.s32.totalorder %s34, 5
      %p69 = por %p67, %p68
      %p71 = scmp.ne.s32.totalorder %s54, %s70
      %p72 = scmp.eq.s32.totalorder %s34, 0
      %p73 = por %p71, %p72
      %s74 = ssub.s32 %s35, %s47
      %s75 = ssub.s32 %s36, %s43
      %s76 = sor.u32 %s74, %s75
      %p77 = scmp.eq.s32.totalorder %s76, 0
      %s79 = sadd.s32 %s78, 1
      %s80 = scalar_select %p77, %s78, %s79
      %p83 = pneg %p77
      %p84 = scmp.eq.s32.totalorder %s28, 5
      %p85 = por %p83, %p84
      %p86 = scmp.ne.s32.totalorder %s78, %s81
      %p87 = scmp.eq.s32.totalorder %s28, 0
      %p88 = por %p86, %p87
      %p89 = scmp.ne.s32.totalorder %s78, %s81
      %p90 = scmp.eq.s32.totalorder %s33, 5
      %p91 = por %p89, %p90
      %p92 = scmp.ne.s32.totalorder %s81, %s82
      %p93 = scmp.eq.s32.totalorder %s33, 0
      %p94 = por %p92, %p93
      %p95 = scmp.ne.s32.totalorder %s81, %s82
      %p96 = scmp.eq.s32.totalorder %s34, 5
      %p97 = por %p95, %p96
      %p99 = scmp.ne.s32.totalorder %s82, %s98
      %p100 = scmp.eq.s32.totalorder %s34, 0
      %p101 = por %p99, %p100
      %s103 = sadd.s32 %s102, 1
      %p106 = scmp.eq.s32.totalorder %s28, 5
      %p107 = scmp.ne.s32.totalorder %s102, %s104
      %p108 = scmp.eq.s32.totalorder %s28, 0
      %p109 = por %p107, %p108
      %p110 = scmp.ne.s32.totalorder %s102, %s104
      %p111 = scmp.eq.s32.totalorder %s33, 5
      %p112 = por %p110, %p111
      %p113 = scmp.ne.s32.totalorder %s104, %s105
      %p114 = scmp.eq.s32.totalorder %s33, 0
      %p115 = por %p113, %p114
      %p116 = scmp.ne.s32.totalorder %s104, %s105
      %p117 = scmp.eq.s32.totalorder %s34, 5
      %p118 = por %p116, %p117
      %p120 = scmp.ne.s32.totalorder %s105, %s119
      %p121 = scmp.eq.s32.totalorder %s34, 0
      %p122 = por %p120, %p121
      %s124 = sadd.s32 %s123, 1
      %p127 = scmp.eq.s32.totalorder %s28, 5
      %p128 = scmp.ne.s32.totalorder %s123, %s125
      %p129 = scmp.eq.s32.totalorder %s28, 0
      %p130 = por %p128, %p129
      %p131 = scmp.ne.s32.totalorder %s123, %s125
      %p132 = scmp.eq.s32.totalorder %s33, 5
      %p133 = por %p131, %p132
      %p134 = scmp.ne.s32.totalorder %s125, %s126
      %p135 = scmp.eq.s32.totalorder %s33, 0
      %p136 = por %p134, %p135
      %p137 = scmp.ne.s32.totalorder %s125, %s126
      %p138 = scmp.eq.s32.totalorder %s34, 5
      %p139 = por %p137, %p138
      %p141 = scmp.ne.s32.totalorder %s126, %s140
      %p142 = scmp.eq.s32.totalorder %s34, 0
      %p143 = por %p141, %p142
      %s144 = ssub.s32 %s36, %s43
      %p145 = scmp.eq.s32.totalorder %s144, 0
      %s147 = sadd.s32 %s146, 1
      %s148 = scalar_select %p145, %s146, %s147
      %p151 = pneg %p145
      %p152 = scmp.eq.s32.totalorder %s28, 5
      %p153 = por %p151, %p152
      %p154 = scmp.ne.s32.totalorder %s146, %s149
      %p155 = scmp.eq.s32.totalorder %s28, 0
      %p156 = por %p154, %p155
      %p157 = scmp.ne.s32.totalorder %s146, %s149
      %p158 = scmp.eq.s32.totalorder %s33, 5
      %p159 = por %p157, %p158
      %p160 = scmp.ne.s32.totalorder %s149, %s150
      %p161 = scmp.eq.s32.totalorder %s33, 0
      %p162 = por %p160, %p161
      %p163 = scmp.ne.s32.totalorder %s149, %s150
      %p164 = scmp.eq.s32.totalorder %s34, 5
      %p165 = por %p163, %p164
      %p167 = scmp.ne.s32.totalorder %s150, %s166
      %p168 = scmp.eq.s32.totalorder %s34, 0
      %p169 = por %p167, %p168
      %s171 = sadd.s32 %s170, 1
      %p174 = scmp.eq.s32.totalorder %s28, 5
      %p175 = scmp.ne.s32.totalorder %s170, %s172
      %p176 = scmp.eq.s32.totalorder %s28, 0
      %p177 = por %p175, %p176
      %p178 = scmp.ne.s32.totalorder %s170, %s172
      %p179 = scmp.eq.s32.totalorder %s33, 5
      %p180 = por %p178, %p179
      %p181 = scmp.ne.s32.totalorder %s172, %s173
      %p182 = scmp.eq.s32.totalorder %s33, 0
      %p183 = por %p181, %p182
      %p184 = scmp.ne.s32.totalorder %s172, %s173
      %p185 = scmp.eq.s32.totalorder %s34, 5
      %p186 = por %p184, %p185
      %p188 = scmp.ne.s32.totalorder %s173, %s187
      %p189 = scmp.eq.s32.totalorder %s34, 0
      %p190 = por %p188, %p189
      %s192 = sadd.s32 %s191, 1
      %p195 = scmp.eq.s32.totalorder %s28, 5
      %p196 = scmp.ne.s32.totalorder %s191, %s193
      %p197 = scmp.eq.s32.totalorder %s28, 0
      %p198 = por %p196, %p197
      %p199 = scmp.ne.s32.totalorder %s191, %s193
      %p200 = scmp.eq.s32.totalorder %s33, 5
      %p201 = por %p199, %p200
      %p202 = scmp.ne.s32.totalorder %s193, %s194
      %p203 = scmp.eq.s32.totalorder %s33, 0
      %p204 = por %p202, %p203
      %p205 = scmp.ne.s32.totalorder %s193, %s194
      %p206 = scmp.eq.s32.totalorder %s34, 5
      %p207 = por %p205, %p206
      %p209 = scmp.ne.s32.totalorder %s194, %s208
      %p210 = scmp.eq.s32.totalorder %s34, 0
      %p211 = por %p209, %p210
      %s213 = sadd.s32 %s212, 1
      %p216 = scmp.eq.s32.totalorder %s28, 5
      %p217 = scmp.ne.s32.totalorder %s212, %s214
      %p218 = scmp.eq.s32.totalorder %s28, 0
      %p219 = por %p217, %p218
      %p220 = scmp.ne.s32.totalorder %s212, %s214
      %p221 = scmp.eq.s32.totalorder %s33, 5
      %p222 = por %p220, %p221
      %p223 = scmp.ne.s32.totalorder %s214, %s215
      %p224 = scmp.eq.s32.totalorder %s33, 0
      %p225 = por %p223, %p224
      %p226 = scmp.ne.s32.totalorder %s214, %s215
      %p227 = scmp.eq.s32.totalorder %s34, 5
      %p228 = por %p226, %p227
      %p230 = scmp.ne.s32.totalorder %s215, %s229
      %p231 = scmp.eq.s32.totalorder %s34, 0
      %p232 = por %p230, %p231
      %s234 = sadd.s32 %s233, 1
      %p237 = scmp.eq.s32.totalorder %s28, 5
      %p238 = scmp.ne.s32.totalorder %s233, %s235
      %p239 = scmp.eq.s32.totalorder %s28, 0
      %p240 = por %p238, %p239
      %p241 = scmp.ne.s32.totalorder %s233, %s235
      %p242 = scmp.eq.s32.totalorder %s33, 5
      %p243 = por %p241, %p242
      %p244 = scmp.ne.s32.totalorder %s235, %s236
      %p245 = scmp.eq.s32.totalorder %s33, 0
      %p246 = por %p244, %p245
      %p247 = scmp.ne.s32.totalorder %s235, %s236
      %p248 = scmp.eq.s32.totalorder %s34, 5
      %p249 = por %p247, %p248
      %p251 = scmp.ne.s32.totalorder %s236, %s250
      %p252 = scmp.eq.s32.totalorder %s34, 0
      %p253 = por %p251, %p252
      %s254 = ssub.s32 %s35, %s47
      %p255 = scmp.eq.s32.totalorder %s254, 0
      %s257 = sadd.s32 %s256, 1
      %s258 = scalar_select %p255, %s256, %s257
      %p261 = pneg %p255
      %p262 = scmp.eq.s32.totalorder %s28, 5
      %p263 = por %p261, %p262
      %p264 = scmp.ne.s32.totalorder %s256, %s259
      %p265 = scmp.eq.s32.totalorder %s28, 0
      %p266 = por %p264, %p265
      %p267 = scmp.ne.s32.totalorder %s256, %s259
      %p268 = scmp.eq.s32.totalorder %s33, 5
      %p269 = por %p267, %p268
      %p270 = scmp.ne.s32.totalorder %s259, %s260
      %p271 = scmp.eq.s32.totalorder %s33, 0
      %p272 = por %p270, %p271
      %p273 = scmp.ne.s32.totalorder %s259, %s260
      %p274 = scmp.eq.s32.totalorder %s34, 5
      %p275 = por %p273, %p274
      %p277 = scmp.ne.s32.totalorder %s260, %s276
      %p278 = scmp.eq.s32.totalorder %s34, 0
      %p279 = por %p277, %p278
      %p280 = scmp.le.s32.totalorder 1, %s28
      %p281 = scmp.lt.s32.totalorder %s28, 7
      %p282 = pnand %p280, %p281
      %p283 = pneg %p282
      // Predicated region
      $region9: #{tpu_custom_call.1} parent=5 // pred_check
        _
      $region10: #{tpu_custom_call.1} parent=5 // pred_check_branch
        %285 = sbr.rel (%p282) target = $region12
      $region11: #{tpu_custom_call.1} parent=5 // pred_region
        %s286 = ssub.s32 %s28, 1
        // Predicated region
        $region13: #{tpu_custom_call.1} parent=11 // pred_check
          %p287 = pneg %p115
        $region14: #{tpu_custom_call.1} parent=11 // pred_check_branch
          %289 = sbr.rel (%p287) target = $region16
        $region15: #{tpu_custom_call.1} parent=11 // pred_region
          %s291 = ssub.s32 2048, 2048
          %292 = vsyncadd [#allocation7], %s291
          %s293 = sshll.u32 [#allocation8], 4
          %s294 = int_to_ptr.vmem [resolvable:$true] %s293
          %299 = dma.hbm_to_vmem [thread:$0]  %s2, 2048, %s294, [#allocation7], 128, 128, 8
        $region16: #{tpu_custom_call.1} parent=11 // pred_fallthru
          _
        // Predicated region
        $region17: #{tpu_custom_call.1} parent=11 // pred_check
          %p300 = pneg %p136
        $region18: #{tpu_custom_call.1} parent=11 // pred_check_branch
          %302 = sbr.rel (%p300) target = $region20
        $region19: #{tpu_custom_call.1} parent=11 // pred_region
          _
        $region20: #{tpu_custom_call.1} parent=11 // pred_fallthru
          _
        // Predicated region
        $region21: #{tpu_custom_call.1} parent=11 // pred_check
          %p303 = pneg %p183
        $region22: #{tpu_custom_call.1} parent=11 // pred_check_branch
          %305 = sbr.rel (%p303) target = $region24
        $region23: #{tpu_custom_call.1} parent=11 // pred_region
          _
        $region24: #{tpu_custom_call.1} parent=11 // pred_fallthru
          _
        // Predicated region
        $region25: #{tpu_custom_call.1} parent=11 // pred_check
          %p306 = pneg %p204
        $region26: #{tpu_custom_call.1} parent=11 // pred_check_branch
          %308 = sbr.rel (%p306) target = $region28
        $region27: #{tpu_custom_call.1} parent=11 // pred_region
          %s310 = ssub.s32 2048, 2048
          %311 = vsyncadd [#allocation10], %s310
          %s312 = sshll.u32 [#allocation11], 4
          %s313 = int_to_ptr.vmem [resolvable:$true] %s312
          %318 = dma.hbm_to_vmem [thread:$0]  %s6, 2048, %s313, [#allocation10], 128, 128, 8
        $region28: #{tpu_custom_call.1} parent=11 // pred_fallthru
          _
        // Predicated region
        $region29: #{tpu_custom_call.1} parent=11 // pred_check
          %p319 = pneg %p225
        $region30: #{tpu_custom_call.1} parent=11 // pred_check_branch
          %321 = sbr.rel (%p319) target = $region32
        $region31: #{tpu_custom_call.1} parent=11 // pred_region
          %s323 = ssub.s32 2048, 2048
          %324 = vsyncadd [#allocation13], %s323
          %s325 = sshll.u32 [#allocation12], 4
          %s326 = int_to_ptr.vmem [resolvable:$true] %s325
          %331 = dma.hbm_to_vmem [thread:$0]  %s7, 2048, %s326, [#allocation13], 128, 128, 8
        $region32: #{tpu_custom_call.1} parent=11 // pred_fallthru
          _
        // Predicated region
        $region33: #{tpu_custom_call.1} parent=11 // pred_check
          %p332 = pneg %p246
        $region34: #{tpu_custom_call.1} parent=11 // pred_check_branch
          %334 = sbr.rel (%p332) target = $region36
        $region35: #{tpu_custom_call.1} parent=11 // pred_region
          _
        $region36: #{tpu_custom_call.1} parent=11 // pred_fallthru
          _
      $region12: #{tpu_custom_call.1} parent=5 // pred_fallthru
        _
      %p335 = scmp.lt.s32.totalorder %s28, 6
      // Predicated region
      $region37: #{tpu_custom_call.1} parent=5 // pred_check
        %p336 = pneg %p335
      $region38: #{tpu_custom_call.1} parent=5 // pred_check_branch
        %338 = sbr.rel (%p336) target = $region40
      $region39: #{tpu_custom_call.1} parent=5 // pred_region
        // Predicated region
        $region41: #{tpu_custom_call.1} parent=39 // pred_check
          %p339 = pneg %p60
        $region42: #{tpu_custom_call.1} parent=39 // pred_check_branch
          %341 = sbr.rel (%p339) target = $region44
        $region43: #{tpu_custom_call.1} parent=39 // pred_region
          %s342 = sand.u32 %s50, 1
          %s343 = scalar_lea.sflag [#allocation4], %s342
          %s344 = sand.u32 %s50, 1
          %s345 = smul.addr %s344, 16
          %s346 = scalar_lea.vmem [#allocation3], %s345
          %s347 = smul.u32 2, %s35
          %s348 = ssub.s32 3, %s347
          %p349 = scmp.lt.s32.totalorder %s348, 2
          %s350 = scalar_select %p349, %s348, 2
          %s351 = smul.u32 128, %s350
          %s353 = ssub.s32 256, %s351
          %354 = vsyncadd %s343, %s353
          %p355 = scmp.ne.s32.totalorder 0, %s351
          %s356 = smul.addr %s347, 128
          %s357 = scalar_lea.hbm %s0, %s356
          %s358 = smul.u32 8, %s350
          %s359 = sshll.u32 %s346, 4
          %s360 = int_to_ptr.vmem [resolvable:$true] %s359
          %s361 = sshll.u32 %s358, 4
          %365 = dma.hbm_to_vmem [thread:$0]  (%p355), %s357, %s361, %s360, %s343, 128, 128, 8
        $region44: #{tpu_custom_call.1} parent=39 // pred_fallthru
          _
        // Predicated region
        $region45: #{tpu_custom_call.1} parent=39 // pred_check
          %p366 = pneg %p88
        $region46: #{tpu_custom_call.1} parent=39 // pred_check_branch
          %368 = sbr.rel (%p366) target = $region48
        $region47: #{tpu_custom_call.1} parent=39 // pred_region
          %s369 = sand.u32 %s28, 1
          %s370 = scalar_lea.sflag [#allocation7], %s369
          %s371 = sand.u32 %s78, 1
          %s372 = smul.addr %s371, 16
          %s373 = scalar_lea.vmem [#allocation6], %s372
          %s374 = smul.u32 2, %s35
          %s375 = ssub.s32 3, %s374
          %p376 = scmp.lt.s32.totalorder %s375, 2
          %s377 = scalar_select %p376, %s375, 2
          %s378 = smul.u32 128, %s377
          %s380 = ssub.s32 256, %s378
          %381 = vsyncadd %s370, %s380
          %p382 = scmp.ne.s32.totalorder 0, %s378
          %s383 = smul.addr %s374, 3
          %s384 = sadd.s32 %s36, %s383
          %s385 = smul.addr %s384, 128
          %s386 = scalar_lea.hbm %s1, %s385
          %s387 = smul.u32 8, %s377
          %s388 = sshll.u32 %s373, 4
          %s389 = int_to_ptr.vmem [resolvable:$true] %s388
          %s390 = sshll.u32 %s387, 4
          %394 = dma.hbm_to_vmem [thread:$0]  (%p382), %s386, %s390, %s389, %s370, 384, 128, 8
        $region48: #{tpu_custom_call.1} parent=39 // pred_fallthru
          _
        // Predicated region
        $region49: #{tpu_custom_call.1} parent=39 // pred_check
          %p395 = pneg %p156
        $region50: #{tpu_custom_call.1} parent=39 // pred_check_branch
          %397 = sbr.rel (%p395) target = $region52
        $region51: #{tpu_custom_call.1} parent=39 // pred_region
          %s398 = sand.u32 %s28, 1
          %s399 = scalar_lea.sflag [#allocation10], %s398
          %s400 = sand.u32 %s146, 1
          %s401 = smul.addr %s400, 128
          %s402 = scalar_lea.vmem [#allocation9], %s401
          %s403 = smul.u32 16, %s36
          %s405 = ssub.s32 2048, 2048
          %406 = vsyncadd %s399, %s405
          %s407 = smul.addr %s403, 128
          %s408 = scalar_lea.hbm %s4, %s407
          %s409 = sshll.u32 %s402, 4
          %s410 = int_to_ptr.vmem [resolvable:$true] %s409
          %415 = dma.hbm_to_vmem [thread:$0]  %s408, 2048, %s410, %s399, 128, 128, 8
        $region52: #{tpu_custom_call.1} parent=39 // pred_fallthru
          _
      $region40: #{tpu_custom_call.1} parent=5 // pred_fallthru
        _
      %p416 = scmp.le.s32.totalorder 1, %s28
      %p417 = scmp.lt.s32.totalorder %s28, 7
      %p418 = pnand %p416, %p417
      %p419 = pneg %p418
      // Predicated region
      $region53: #{tpu_custom_call.1} parent=5 // pred_check
        _
      $region54: #{tpu_custom_call.1} parent=5 // pred_check_branch
        %421 = sbr.rel (%p418) target = $region56
      $region55: #{tpu_custom_call.1} parent=5 // pred_region
        %s422 = ssub.s32 %s28, 1
        %s423 = sand.u32 %s53, 1
        %s424 = scalar_lea.sflag [#allocation4], %s423
        %s425 = sand.u32 %s53, 1
        %s426 = smul.addr %s425, 16
        %s427 = scalar_lea.vmem [#allocation3], %s426
        // Predicated region
        $region57: #{tpu_custom_call.1} parent=55 // pred_check
          %p428 = pneg %p66
        $region58: #{tpu_custom_call.1} parent=55 // pred_check_branch
          %430 = sbr.rel (%p428) target = $region60
        $region59: #{tpu_custom_call.1} parent=55 // pred_region
          %431 = dma.done %s424, 256
        $region60: #{tpu_custom_call.1} parent=55 // pred_fallthru
          _
        %s432 = sand.u32 %s33, 1
        %s433 = scalar_lea.sflag [#allocation7], %s432
        %s434 = sand.u32 %s81, 1
        %s435 = smul.addr %s434, 16
        %s436 = scalar_lea.vmem [#allocation6], %s435
        // Predicated region
        $region61: #{tpu_custom_call.1} parent=55 // pred_check
          %p437 = pneg %p94
        $region62: #{tpu_custom_call.1} parent=55 // pred_check_branch
          %439 = sbr.rel (%p437) target = $region64
        $region63: #{tpu_custom_call.1} parent=55 // pred_region
          %440 = dma.done %s433, 256
        $region64: #{tpu_custom_call.1} parent=55 // pred_fallthru
          _
        // Predicated region
        $region65: #{tpu_custom_call.1} parent=55 // pred_check
          %p441 = pneg %p115
        $region66: #{tpu_custom_call.1} parent=55 // pred_check_branch
          %443 = sbr.rel (%p441) target = $region68
        $region67: #{tpu_custom_call.1} parent=55 // pred_region
          %444 = dma.done [#allocation7], 2048
        $region68: #{tpu_custom_call.1} parent=55 // pred_fallthru
          _
        %s445 = sand.u32 %s33, 1
        %s446 = scalar_lea.sflag [#allocation10], %s445
        %s447 = sand.u32 %s149, 1
        %s448 = smul.addr %s447, 128
        %s449 = scalar_lea.vmem [#allocation9], %s448
        // Predicated region
        $region69: #{tpu_custom_call.1} parent=55 // pred_check
          %p450 = pneg %p162
        $region70: #{tpu_custom_call.1} parent=55 // pred_check_branch
          %452 = sbr.rel (%p450) target = $region72
        $region71: #{tpu_custom_call.1} parent=55 // pred_region
          %453 = dma.done %s446, 2048
        $region72: #{tpu_custom_call.1} parent=55 // pred_fallthru
          _
        // Predicated region
        $region73: #{tpu_custom_call.1} parent=55 // pred_check
          %p454 = pneg %p204
        $region74: #{tpu_custom_call.1} parent=55 // pred_check_branch
          %456 = sbr.rel (%p454) target = $region76
        $region75: #{tpu_custom_call.1} parent=55 // pred_region
          %457 = dma.done [#allocation10], 2048
        $region76: #{tpu_custom_call.1} parent=55 // pred_fallthru
          _
        // Predicated region
        $region77: #{tpu_custom_call.1} parent=55 // pred_check
          %p458 = pneg %p225
        $region78: #{tpu_custom_call.1} parent=55 // pred_check_branch
          %460 = sbr.rel (%p458) target = $region80
        $region79: #{tpu_custom_call.1} parent=55 // pred_region
          %461 = dma.done [#allocation13], 2048
        $region80: #{tpu_custom_call.1} parent=55 // pred_fallthru
          _
        %s462 = sand.u32 %s53, 1
        %s463 = scalar_lea.sflag [#allocation4], %s462
        %s464 = sand.u32 %s53, 1
        %s465 = smul.addr %s464, 16
        %s466 = scalar_lea.vmem [#allocation3], %s465
        %p467 = pneg %p66
        %p468 = pneg %p63
        %s469 = sand.u32 %s33, 1
        %s470 = scalar_lea.sflag [#allocation7], %s469
        %s471 = sand.u32 %s81, 1
        %s472 = smul.addr %s471, 16
        %s473 = scalar_lea.vmem [#allocation6], %s472
        %p474 = pneg %p94
        %p475 = pneg %p91
        %p476 = pneg %p115
        %p477 = pneg %p112
        %p478 = pneg %p136
        %p479 = pneg %p133
        %s480 = sand.u32 %s33, 1
        %s481 = scalar_lea.sflag [#allocation10], %s480
        %s482 = sand.u32 %s149, 1
        %s483 = smul.addr %s482, 128
        %s484 = scalar_lea.vmem [#allocation9], %s483
        %p485 = pneg %p162
        %p486 = pneg %p159
        %p487 = pneg %p183
        %p488 = pneg %p180
        %p489 = pneg %p204
        %p490 = pneg %p201
        %p491 = pneg %p225
        %p492 = pneg %p222
        %p493 = pneg %p246
        %p494 = pneg %p243
        %p495 = pneg %p272
        %p496 = pneg %p269
        %s497 = sand.u32 %s259, 1
        %s498 = scalar_lea.sflag [#allocation5], %s497
        %s499 = sand.u32 %s259, 1
        %s500 = smul.addr %s499, 16
        %s501 = scalar_lea.vmem [#allocation14], %s500
        %s502 = smul.u32 2, %s37
        %s503 = ssub.s32 3, %s502
        %p504 = scmp.lt.s32.totalorder %s503, 2
        %s505 = scalar_select %p504, %s503, 2
        %s506 = smul.u32 128, %s505
        %s507 = smul.u32 2, %s37
        %s508 = ssub.s32 3, %s507
        %p509 = scmp.lt.s32.totalorder %s508, 2
        %s510 = scalar_select %p509, %s508, 2
        %s511 = smul.u32 128, %s510
        %s512 = smul.u32 16, %s38
        %s513 = smul.u32 2, %s37
        %s514 = ssub.s32 3, %s513
        %p515 = scmp.lt.s32.totalorder %s514, 2
        %s516 = scalar_select %p515, %s514, 2
        %s517 = smul.u32 128, %s516
        %p518 = scmp.eq.s32.totalorder %s38, 0
        // Predicated region
        $region81: #{tpu_custom_call.1} parent=55 // pred_check
          %p519 = pneg %p518
        $region82: #{tpu_custom_call.1} parent=55 // pred_check_branch
          %521 = sbr.rel (%p519) target = $region84
        $region83: #{tpu_custom_call.1} parent=55 // pred_region
          %522 = vst [vmem:[#allocation2] sm:$0xff] 0.0
          %523 = vst [vmem:[#allocation2 + $0x8] sm:$0xff] 0.0
        $region84: #{tpu_custom_call.1} parent=55 // pred_fallthru
          _
        %v524 = vld [vmem:[#allocation2] sm:$0xff]
        %v525 = vld [vmem:[#allocation2 + $0x8] sm:$0xff]
        %v526 = vld [vmem:[%s436] sm:$0xff]
        %v527 = vld [vmem:[%s436 + $0x8] sm:$0xff]
        %v528 = vld [vmem:[%s449] sm:$0xff]
        %v529 = vld [vmem:[%s449 + $0x8] sm:$0xff]
        %v530 = vld [vmem:[%s449 + $0x10] sm:$0xff]
        %v531 = vld [vmem:[%s449 + $0x18] sm:$0xff]
        %v532 = vld [vmem:[%s449 + $0x20] sm:$0xff]
        %v533 = vld [vmem:[%s449 + $0x28] sm:$0xff]
        %v534 = vld [vmem:[%s449 + $0x30] sm:$0xff]
        %v535 = vld [vmem:[%s449 + $0x38] sm:$0xff]
        %v536 = vld [vmem:[%s449 + $0x40] sm:$0xff]
        %v537 = vld [vmem:[%s449 + $0x48] sm:$0xff]
        %v538 = vld [vmem:[%s449 + $0x50] sm:$0xff]
        %v539 = vld [vmem:[%s449 + $0x58] sm:$0xff]
        %v540 = vld [vmem:[%s449 + $0x60] sm:$0xff]
        %v541 = vld [vmem:[%s449 + $0x68] sm:$0xff]
        %v542 = vld [vmem:[%s449 + $0x70] sm:$0xff]
        %v543 = vld [vmem:[%s449 + $0x78] sm:$0xff]
        %544 = vmatprep.subr.mxu0 0.0
        %545 = vmatpush1.msra.mxu0 %v528
        %546 = vmatprep.subr.mxu0 0.0
        %547 = vmatpush1.msra.mxu0 %v529
        %548 = vmatprep.subr.mxu0 0.0
        %549 = vmatpush1.msra.mxu0 %v530
        %550 = vmatprep.subr.mxu0 0.0
        %551 = vmatpush1.msra.mxu0 %v531
        %552 = vmatprep.subr.mxu0 0.0
        %553 = vmatpush1.msra.mxu0 %v532
        %554 = vmatprep.subr.mxu0 0.0
        %555 = vmatpush1.msra.mxu0 %v533
        %556 = vmatprep.subr.mxu0 0.0
        %557 = vmatpush1.msra.mxu0 %v534
        %558 = vmatprep.subr.mxu0 0.0
        %559 = vmatpush1.msra.mxu0 %v535
        %560 = vmatprep.subr.mxu0 0.0
        %561 = vmatpush1.msra.mxu0 %v536
        %562 = vmatprep.subr.mxu0 0.0
        %563 = vmatpush1.msra.mxu0 %v537
        %564 = vmatprep.subr.mxu0 0.0
        %565 = vmatpush1.msra.mxu0 %v538
        %566 = vmatprep.subr.mxu0 0.0
        %567 = vmatpush1.msra.mxu0 %v539
        %568 = vmatprep.subr.mxu0 0.0
        %569 = vmatpush1.msra.mxu0 %v540
        %570 = vmatprep.subr.mxu0 0.0
        %571 = vmatpush1.msra.mxu0 %v541
        %572 = vmatprep.subr.mxu0 0.0
        %573 = vmatpush1.msra.mxu0 %v542
        %574 = vmatprep.subr.mxu0 0.0
        %575 = vmatpush1.msra.mxu0 %v543
        %576 = vmatprep.subr.mxu0 0.0
        %577 = vmatpush1.msra.mxu0 0.0
        %578 = vmatprep.subr.mxu0 0.0
        %579 = vmatpush1.msra.mxu0 0.0
        %580 = vmatprep.subr.mxu0 0.0
        %581 = vmatpush1.msra.mxu0 0.0
        %582 = vmatprep.subr.mxu0 0.0
        %583 = vmatpush1.msra.mxu0 0.0
        %584 = vmatprep.subr.mxu0 0.0
        %585 = vmatpush1.msra.mxu0 0.0
        %586 = vmatprep.subr.mxu0 0.0
        %587 = vmatpush1.msra.mxu0 0.0
        %588 = vmatprep.subr.mxu0 0.0
        %589 = vmatpush1.msra.mxu0 0.0
        %590 = vmatprep.subr.mxu0 0.0
        %591 = vmatpush1.msra.mxu0 0.0
        %592 = vmatprep.subr.mxu0 0.0
        %593 = vmatpush1.msra.mxu0 0.0
        %594 = vmatprep.subr.mxu0 0.0
        %595 = vmatpush1.msra.mxu0 0.0
        %596 = vmatprep.subr.mxu0 0.0
        %597 = vmatpush1.msra.mxu0 0.0
        %598 = vmatprep.subr.mxu0 0.0
        %599 = vmatpush1.msra.mxu0 0.0
        %600 = vmatprep.subr.mxu0 0.0
        %601 = vmatpush1.msra.mxu0 0.0
        %602 = vmatprep.subr.mxu0 0.0
        %603 = vmatpush1.msra.mxu0 0.0
        %604 = vmatprep.subr.mxu0 0.0
        %605 = vmatpush1.msra.mxu0 0.0
        %606 = vmatprep.subr.mxu0 0.0
        %607 = vmatpush1.msra.mxu0 0.0
        %608 = vmatprep.mubr.f32.mxu0 0.0
        %609 = vmatmul.mubr.f32.gmra.mrb[0].mxu0 %v526
        %v610 = vpop.f32.mrb[0].mxu0
        %v611 = vadd.f32 0.0, %v610
        %v612 = vpop.f32.mrb[0].mxu0
        %613 = vmatprep.mubr.f32.mxu0 0.0
        %614 = vmatmul.mubr.f32.gmra.mrb[0].mxu0 %v527
        %v615 = vpop.f32.mrb[0].mxu0
        %v616 = vadd.f32 0.0, %v615
        %v617 = vpop.f32.mrb[0].mxu0
        %618 = vdwg.mxu0
        %v619 = vadd.f32 %v524, %v611
        %v620 = vadd.f32 %v525, %v616
        %621 = vst [vmem:[#allocation2] sm:$0xff] %v619
        %622 = vst [vmem:[#allocation2 + $0x8] sm:$0xff] %v620
        %p623 = scmp.eq.s32.totalorder %s38, 2
        // Predicated region
        $region85: #{tpu_custom_call.1} parent=55 // pred_check
          %p624 = pneg %p623
        $region86: #{tpu_custom_call.1} parent=55 // pred_check_branch
          %626 = sbr.rel (%p624) target = $region88
        $region87: #{tpu_custom_call.1} parent=55 // pred_region
          %v627 = vld [vmem:[%s427] sm:$0xff]
          %v628 = vld [vmem:[%s427 + $0x8] sm:$0xff]
          %v629 = vld [vmem:[#allocation8] sm:$0xff]
          %v630 = vld [vmem:[#allocation8 + $0x8] sm:$0xff]
          %v631 = vld [vmem:[#allocation8 + $0x10] sm:$0xff]
          %v632 = vld [vmem:[#allocation8 + $0x18] sm:$0xff]
          %v633 = vld [vmem:[#allocation8 + $0x20] sm:$0xff]
          %v634 = vld [vmem:[#allocation8 + $0x28] sm:$0xff]
          %v635 = vld [vmem:[#allocation8 + $0x30] sm:$0xff]
          %v636 = vld [vmem:[#allocation8 + $0x38] sm:$0xff]
          %v637 = vld [vmem:[#allocation8 + $0x40] sm:$0xff]
          %v638 = vld [vmem:[#allocation8 + $0x48] sm:$0xff]
          %v639 = vld [vmem:[#allocation8 + $0x50] sm:$0xff]
          %v640 = vld [vmem:[#allocation8 + $0x58] sm:$0xff]
          %v641 = vld [vmem:[#allocation8 + $0x60] sm:$0xff]
          %v642 = vld [vmem:[#allocation8 + $0x68] sm:$0xff]
          %v643 = vld [vmem:[#allocation8 + $0x70] sm:$0xff]
          %v644 = vld [vmem:[#allocation8 + $0x78] sm:$0xff]
          %v645 = vld [vmem:[%s3] sm:$0x1]
          %v647 = vlaneseq
          %v648 = vshrl.u32 %v647, 7
          %v649 = vsub.s32 0, %v648
          %v650 = vrot.slane %v645, %v649
          %652 = vmatprep.subr.mxu0 0.0
          %653 = vmatpush1.msra.mxu0 %v629
          %654 = vmatprep.subr.mxu0 0.0
          %655 = vmatpush1.msra.mxu0 %v630
          %656 = vmatprep.subr.mxu0 0.0
          %657 = vmatpush1.msra.mxu0 %v631
          %658 = vmatprep.subr.mxu0 0.0
          %659 = vmatpush1.msra.mxu0 %v632
          %660 = vmatprep.subr.mxu0 0.0
          %661 = vmatpush1.msra.mxu0 %v633
          %662 = vmatprep.subr.mxu0 0.0
          %663 = vmatpush1.msra.mxu0 %v634
          %664 = vmatprep.subr.mxu0 0.0
          %665 = vmatpush1.msra.mxu0 %v635
          %666 = vmatprep.subr.mxu0 0.0
          %667 = vmatpush1.msra.mxu0 %v636
          %668 = vmatprep.subr.mxu0 0.0
          %669 = vmatpush1.msra.mxu0 %v637
          %670 = vmatprep.subr.mxu0 0.0
          %671 = vmatpush1.msra.mxu0 %v638
          %672 = vmatprep.subr.mxu0 0.0
          %673 = vmatpush1.msra.mxu0 %v639
          %674 = vmatprep.subr.mxu0 0.0
          %675 = vmatpush1.msra.mxu0 %v640
          %676 = vmatprep.subr.mxu0 0.0
          %677 = vmatpush1.msra.mxu0 %v641
          %678 = vmatprep.subr.mxu0 0.0
          %679 = vmatpush1.msra.mxu0 %v642
          %680 = vmatprep.subr.mxu0 0.0
          %681 = vmatpush1.msra.mxu0 %v643
          %682 = vmatprep.subr.mxu0 0.0
          %683 = vmatpush1.msra.mxu0 %v644
          %684 = vmatprep.subr.mxu0 0.0
          %685 = vmatpush1.msra.mxu0 0.0
          %686 = vmatprep.subr.mxu0 0.0
          %687 = vmatpush1.msra.mxu0 0.0
          %688 = vmatprep.subr.mxu0 0.0
          %689 = vmatpush1.msra.mxu0 0.0
          %690 = vmatprep.subr.mxu0 0.0
          %691 = vmatpush1.msra.mxu0 0.0
          %692 = vmatprep.subr.mxu0 0.0
          %693 = vmatpush1.msra.mxu0 0.0
          %694 = vmatprep.subr.mxu0 0.0
          %695 = vmatpush1.msra.mxu0 0.0
          %696 = vmatprep.subr.mxu0 0.0
          %697 = vmatpush1.msra.mxu0 0.0
          %698 = vmatprep.subr.mxu0 0.0
          %699 = vmatpush1.msra.mxu0 0.0
          %700 = vmatprep.subr.mxu0 0.0
          %701 = vmatpush1.msra.mxu0 0.0
          %702 = vmatprep.subr.mxu0 0.0
          %703 = vmatpush1.msra.mxu0 0.0
          %704 = vmatprep.subr.mxu0 0.0
          %705 = vmatpush1.msra.mxu0 0.0
          %706 = vmatprep.subr.mxu0 0.0
          %707 = vmatpush1.msra.mxu0 0.0
          %708 = vmatprep.subr.mxu0 0.0
          %709 = vmatpush1.msra.mxu0 0.0
          %710 = vmatprep.subr.mxu0 0.0
          %711 = vmatpush1.msra.mxu0 0.0
          %712 = vmatprep.subr.mxu0 0.0
          %713 = vmatpush1.msra.mxu0 0.0
          %714 = vmatprep.subr.mxu0 0.0
          %715 = vmatpush1.msra.mxu0 0.0
          %716 = vmatprep.mubr.f32.mxu0 0.0
          %717 = vmatmul.mubr.f32.gmra.mrb[0].mxu0 %v627
          %v718 = vpop.f32.mrb[0].mxu0
          %v719 = vadd.f32 %v650, %v718
          %v720 = vpop.f32.mrb[0].mxu0
          %721 = vmatprep.mubr.f32.mxu0 0.0
          %722 = vmatmul.mubr.f32.gmra.mrb[0].mxu0 %v628
          %v723 = vpop.f32.mrb[0].mxu0
          %v724 = vadd.f32 %v650, %v723
          %v725 = vpop.f32.mrb[0].mxu0
          %726 = vdwg.mxu0
          %v727 = vld [vmem:[#allocation2] sm:$0xff]
          %v728 = vld [vmem:[#allocation2 + $0x8] sm:$0xff]
          %v729 = vld [vmem:[%s5] sm:$0x1]
          %v731 = vlaneseq
          %v732 = vshrl.u32 %v731, 7
          %v733 = vsub.s32 0, %v732
          %v734 = vrot.slane %v729, %v733
          %v736 = vadd.f32 %v727, %v734
          %v737 = vadd.f32 %v728, %v734
          %v738 = vld [vmem:[#allocation11] sm:$0xff]
          %v739 = vld [vmem:[#allocation11 + $0x8] sm:$0xff]
          %v740 = vld [vmem:[#allocation11 + $0x10] sm:$0xff]
          %v741 = vld [vmem:[#allocation11 + $0x18] sm:$0xff]
          %v742 = vld [vmem:[#allocation11 + $0x20] sm:$0xff]
          %v743 = vld [vmem:[#allocation11 + $0x28] sm:$0xff]
          %v744 = vld [vmem:[#allocation11 + $0x30] sm:$0xff]
          %v745 = vld [vmem:[#allocation11 + $0x38] sm:$0xff]
          %v746 = vld [vmem:[#allocation11 + $0x40] sm:$0xff]
          %v747 = vld [vmem:[#allocation11 + $0x48] sm:$0xff]
          %v748 = vld [vmem:[#allocation11 + $0x50] sm:$0xff]
          %v749 = vld [vmem:[#allocation11 + $0x58] sm:$0xff]
          %v750 = vld [vmem:[#allocation11 + $0x60] sm:$0xff]
          %v751 = vld [vmem:[#allocation11 + $0x68] sm:$0xff]
          %v752 = vld [vmem:[#allocation11 + $0x70] sm:$0xff]
          %v753 = vld [vmem:[#allocation11 + $0x78] sm:$0xff]
          %v754 = vld [vmem:[#allocation12] sm:$0xff]
          %v755 = vld [vmem:[#allocation12 + $0x8] sm:$0xff]
          %v756 = vld [vmem:[#allocation12 + $0x10] sm:$0xff]
          %v757 = vld [vmem:[#allocation12 + $0x18] sm:$0xff]
          %v758 = vld [vmem:[#allocation12 + $0x20] sm:$0xff]
          %v759 = vld [vmem:[#allocation12 + $0x28] sm:$0xff]
          %v760 = vld [vmem:[#allocation12 + $0x30] sm:$0xff]
          %v761 = vld [vmem:[#allocation12 + $0x38] sm:$0xff]
          %v762 = vld [vmem:[#allocation12 + $0x40] sm:$0xff]
          %v763 = vld [vmem:[#allocation12 + $0x48] sm:$0xff]
          %v764 = vld [vmem:[#allocation12 + $0x50] sm:$0xff]
          %v765 = vld [vmem:[#allocation12 + $0x58] sm:$0xff]
          %v766 = vld [vmem:[#allocation12 + $0x60] sm:$0xff]
          %v767 = vld [vmem:[#allocation12 + $0x68] sm:$0xff]
          %v768 = vld [vmem:[#allocation12 + $0x70] sm:$0xff]
          %v769 = vld [vmem:[#allocation12 + $0x78] sm:$0xff]
          %770 = vmatprep.subr.mxu0 0.0
          %771 = vmatpush1.msra.mxu0 %v754
          %772 = vmatprep.subr.mxu0 0.0
          %773 = vmatpush1.msra.mxu0 %v755
          %774 = vmatprep.subr.mxu0 0.0
          %775 = vmatpush1.msra.mxu0 %v756
          %776 = vmatprep.subr.mxu0 0.0
          %777 = vmatpush1.msra.mxu0 %v757
          %778 = vmatprep.subr.mxu0 0.0
          %779 = vmatpush1.msra.mxu0 %v758
          %780 = vmatprep.subr.mxu0 0.0
          %781 = vmatpush1.msra.mxu0 %v759
          %782 = vmatprep.subr.mxu0 0.0
          %783 = vmatpush1.msra.mxu0 %v760
          %784 = vmatprep.subr.mxu0 0.0
          %785 = vmatpush1.msra.mxu0 %v761
          %786 = vmatprep.subr.mxu0 0.0
          %787 = vmatpush1.msra.mxu0 %v762
          %788 = vmatprep.subr.mxu0 0.0
          %789 = vmatpush1.msra.mxu0 %v763
          %790 = vmatprep.subr.mxu0 0.0
          %791 = vmatpush1.msra.mxu0 %v764
          %792 = vmatprep.subr.mxu0 0.0
          %793 = vmatpush1.msra.mxu0 %v765
          %794 = vmatprep.subr.mxu0 0.0
          %795 = vmatpush1.msra.mxu0 %v766
          %796 = vmatprep.subr.mxu0 0.0
          %797 = vmatpush1.msra.mxu0 %v767
          %798 = vmatprep.subr.mxu0 0.0
          %799 = vmatpush1.msra.mxu0 %v768
          %800 = vmatprep.subr.mxu0 0.0
          %801 = vmatpush1.msra.mxu0 %v769
          %802 = vmatprep.subr.mxu0 0.0
          %803 = vmatpush1.msra.mxu0 0.0
          %804 = vmatprep.subr.mxu0 0.0
          %805 = vmatpush1.msra.mxu0 0.0
          %806 = vmatprep.subr.mxu0 0.0
          %807 = vmatpush1.msra.mxu0 0.0
          %808 = vmatprep.subr.mxu0 0.0
          %809 = vmatpush1.msra.mxu0 0.0
          %810 = vmatprep.subr.mxu0 0.0
          %811 = vmatpush1.msra.mxu0 0.0
          %812 = vmatprep.subr.mxu0 0.0
          %813 = vmatpush1.msra.mxu0 0.0
          %814 = vmatprep.subr.mxu0 0.0
          %815 = vmatpush1.msra.mxu0 0.0
          %816 = vmatprep.subr.mxu0 0.0
          %817 = vmatpush1.msra.mxu0 0.0
          %818 = vmatprep.subr.mxu0 0.0
          %819 = vmatpush1.msra.mxu0 0.0
          %820 = vmatprep.subr.mxu0 0.0
          %821 = vmatpush1.msra.mxu0 0.0
          %822 = vmatprep.subr.mxu0 0.0
          %823 = vmatpush1.msra.mxu0 0.0
          %824 = vmatprep.subr.mxu0 0.0
          %825 = vmatpush1.msra.mxu0 0.0
          %826 = vmatprep.subr.mxu0 0.0
          %827 = vmatpush1.msra.mxu0 0.0
          %828 = vmatprep.subr.mxu0 0.0
          %829 = vmatpush1.msra.mxu0 0.0
          %830 = vmatprep.subr.mxu0 0.0
          %831 = vmatpush1.msra.mxu0 0.0
          %832 = vmatprep.subr.mxu0 0.0
          %833 = vmatpush1.msra.mxu0 0.0
          %834 = vmatprep.mubr.f32.mxu0 0.0
          %835 = vmatmul.mubr.f32.gmra.mrb[0].mxu0 %v736
          %v836 = vpop.f32.mrb[0].mxu0
          %v837 = vadd.f32 0.0, %v836
          %v838 = vpop.f32.mrb[0].mxu0
          %839 = vmatprep.mubr.f32.mxu0 0.0
          %840 = vmatmul.mubr.f32.gmra.mrb[0].mxu0 %v737
          %v841 = vpop.f32.mrb[0].mxu0
          %v842 = vadd.f32 0.0, %v841
          %v843 = vpop.f32.mrb[0].mxu0
          %844 = vdwg.mxu0
          %845 = vmatprep.subr.mxu0 0.0
          %846 = vmatpush1.msra.mxu0 %v738
          %847 = vmatprep.subr.mxu0 0.0
          %848 = vmatpush1.msra.mxu0 %v739
          %849 = vmatprep.subr.mxu0 0.0
          %850 = vmatpush1.msra.mxu0 %v740
          %851 = vmatprep.subr.mxu0 0.0
          %852 = vmatpush1.msra.mxu0 %v741
          %853 = vmatprep.subr.mxu0 0.0
          %854 = vmatpush1.msra.mxu0 %v742
          %855 = vmatprep.subr.mxu0 0.0
          %856 = vmatpush1.msra.mxu0 %v743
          %857 = vmatprep.subr.mxu0 0.0
          %858 = vmatpush1.msra.mxu0 %v744
          %859 = vmatprep.subr.mxu0 0.0
          %860 = vmatpush1.msra.mxu0 %v745
          %861 = vmatprep.subr.mxu0 0.0
          %862 = vmatpush1.msra.mxu0 %v746
          %863 = vmatprep.subr.mxu0 0.0
          %864 = vmatpush1.msra.mxu0 %v747
          %865 = vmatprep.subr.mxu0 0.0
          %866 = vmatpush1.msra.mxu0 %v748
          %867 = vmatprep.subr.mxu0 0.0
          %868 = vmatpush1.msra.mxu0 %v749
          %869 = vmatprep.subr.mxu0 0.0
          %870 = vmatpush1.msra.mxu0 %v750
          %871 = vmatprep.subr.mxu0 0.0
          %872 = vmatpush1.msra.mxu0 %v751
          %873 = vmatprep.subr.mxu0 0.0
          %874 = vmatpush1.msra.mxu0 %v752
          %875 = vmatprep.subr.mxu0 0.0
          %876 = vmatpush1.msra.mxu0 %v753
          %877 = vmatprep.subr.mxu0 0.0
          %878 = vmatpush1.msra.mxu0 0.0
          %879 = vmatprep.subr.mxu0 0.0
          %880 = vmatpush1.msra.mxu0 0.0
          %881 = vmatprep.subr.mxu0 0.0
          %882 = vmatpush1.msra.mxu0 0.0
          %883 = vmatprep.subr.mxu0 0.0
          %884 = vmatpush1.msra.mxu0 0.0
          %885 = vmatprep.subr.mxu0 0.0
          %886 = vmatpush1.msra.mxu0 0.0
          %887 = vmatprep.subr.mxu0 0.0
          %888 = vmatpush1.msra.mxu0 0.0
          %889 = vmatprep.subr.mxu0 0.0
          %890 = vmatpush1.msra.mxu0 0.0
          %891 = vmatprep.subr.mxu0 0.0
          %892 = vmatpush1.msra.mxu0 0.0
          %893 = vmatprep.subr.mxu0 0.0
          %894 = vmatpush1.msra.mxu0 0.0
          %895 = vmatprep.subr.mxu0 0.0
          %896 = vmatpush1.msra.mxu0 0.0
          %897 = vmatprep.subr.mxu0 0.0
          %898 = vmatpush1.msra.mxu0 0.0
          %899 = vmatprep.subr.mxu0 0.0
          %900 = vmatpush1.msra.mxu0 0.0
          %901 = vmatprep.subr.mxu0 0.0
          %902 = vmatpush1.msra.mxu0 0.0
          %903 = vmatprep.subr.mxu0 0.0
          %904 = vmatpush1.msra.mxu0 0.0
          %905 = vmatprep.subr.mxu0 0.0
          %906 = vmatpush1.msra.mxu0 0.0
          %907 = vmatprep.subr.mxu0 0.0
          %908 = vmatpush1.msra.mxu0 0.0
          %909 = vmatprep.mubr.f32.mxu0 0.0
          %910 = vmatmul.mubr.f32.gmra.mrb[0].mxu0 %v719
          %v911 = vpop.f32.mrb[0].mxu0
          %v912 = vadd.f32 %v837, %v911
          %v913 = vpop.f32.mrb[0].mxu0
          %914 = vmatprep.mubr.f32.mxu0 0.0
          %915 = vmatmul.mubr.f32.gmra.mrb[0].mxu0 %v724
          %v916 = vpop.f32.mrb[0].mxu0
          %v917 = vadd.f32 %v842, %v916
          %v918 = vpop.f32.mrb[0].mxu0
          %919 = vdwg.mxu0
          %v920 = vld [vmem:[%s8] sm:$0x1]
          %v922 = vlaneseq
          %v923 = vshrl.u32 %v922, 7
          %v924 = vsub.s32 0, %v923
          %v925 = vrot.slane %v920, %v924
          %v927 = vadd.f32 %v912, %v925
          %v928 = vadd.f32 %v917, %v925
          %929 = vst [vmem:[%s501] sm:$0xff] %v927
          %930 = vst [vmem:[%s501 + $0x8] sm:$0xff] %v928
        $region88: #{tpu_custom_call.1} parent=55 // pred_fallthru
          _
        %s931 = sand.u32 %s259, 1
        %s932 = scalar_lea.sflag [#allocation5], %s931
        %s933 = sand.u32 %s259, 1
        %s934 = smul.addr %s933, 16
        %s935 = scalar_lea.vmem [#allocation14], %s934
        // Predicated region
        $region89: #{tpu_custom_call.1} parent=55 // pred_check
          %p936 = pneg %p269
        $region90: #{tpu_custom_call.1} parent=55 // pred_check_branch
          %938 = sbr.rel (%p936) target = $region92
        $region91: #{tpu_custom_call.1} parent=55 // pred_region
          %s939 = smul.u32 2, %s37
          %s940 = ssub.s32 3, %s939
          %p941 = scmp.lt.s32.totalorder %s940, 2
          %s942 = scalar_select %p941, %s940, 2
          %s943 = smul.u32 128, %s942
          %s945 = ssub.s32 256, %s943
          %946 = vsyncadd %s932, %s945
          %p947 = scmp.ne.s32.totalorder 0, %s943
          %s948 = smul.addr %s939, 128
          %s949 = scalar_lea.hbm %s9, %s948
          %s950 = smul.u32 8, %s942
          %s951 = sshll.u32 %s935, 4
          %s952 = int_to_ptr.vmem [resolvable:$true] %s951
          %s953 = sshll.u32 %s950, 4
          %957 = dma.vmem_to_hbm [thread:$0]  (%p947), %s952, %s953, %s949, %s932, 128, 128, 8
        $region92: #{tpu_custom_call.1} parent=55 // pred_fallthru
          _
      $region56: #{tpu_custom_call.1} parent=5 // pred_fallthru
        _
      %p958 = scmp.le.s32.totalorder 2, %s28
      // Predicated region
      $region93: #{tpu_custom_call.1} parent=5 // pred_check
        %p959 = pneg %p958
      $region94: #{tpu_custom_call.1} parent=5 // pred_check_branch
        %961 = sbr.rel (%p959) target = $region96
      $region95: #{tpu_custom_call.1} parent=5 // pred_region
        %s962 = ssub.s32 %s28, 2
        // Predicated region
        $region97: #{tpu_custom_call.1} parent=95 // pred_check
          %p963 = pneg %p275
        $region98: #{tpu_custom_call.1} parent=95 // pred_check_branch
          %965 = sbr.rel (%p963) target = $region100
        $region99: #{tpu_custom_call.1} parent=95 // pred_region
          %s966 = sand.u32 %s260, 1
          %s967 = scalar_lea.sflag [#allocation5], %s966
          %s968 = sand.u32 %s260, 1
          %s969 = smul.addr %s968, 16
          %s970 = scalar_lea.vmem [#allocation14], %s969
          %971 = dma.done %s967, 256
        $region100: #{tpu_custom_call.1} parent=95 // pred_fallthru
          _
      $region96: #{tpu_custom_call.1} parent=5 // pred_fallthru
        _
    $region6: #{tpu_custom_call.1} parent=1 // loop_footer
      %s32 = sadd.s32 1, %s28
    $region7: #{tpu_custom_call.1} parent=1 // loop_footer_branch
      %27 = sbr.rel target = $region3
    $region8: #{tpu_custom_call.1} parent=1 // loop_exit
      _
    %972 = vsyncpa [#allocation4], 1
    %s973 = scalar_lea.sflag [#allocation4], 1
    %974 = vsyncpa %s973, 1
    %975 = vsyncpa [#allocation7], 1
    %s976 = scalar_lea.sflag [#allocation7], 1
    %977 = vsyncpa %s976, 1
    %978 = vsyncpa [#allocation10], 1
    %s979 = scalar_lea.sflag [#allocation10], 1
    %980 = vsyncpa %s979, 1
    %981 = vsyncpa [#allocation13], 1
    %982 = vsyncpa [#allocation5], 1
    %s983 = scalar_lea.sflag [#allocation5], 1
    %984 = vsyncpa %s983, 1

</llo_original>
